<compile_context>
chip_gen: v7x
topology: tpu7x:2x2x1
jax: 0.10.0
libtpu: 0.0.40
codegen_flags: <defaults>
</compile_context>

<pallas_src>
import functools
import math

import jax
import jax.numpy as jnp
from jax import lax
from jax.experimental import pallas as pl
from jax.experimental.pallas import tpu as pltpu


# --------------------------------------------------------------------------
# Hardware queries (best-effort; safe fallbacks)
# --------------------------------------------------------------------------
def _vmem_capacity_bytes():
    try:
        return int(pltpu.get_tpu_info().vmem_capacity_bytes)
    except Exception:
        return 64 << 20  # v7x per-TensorCore physical VMEM (smallest of v5e/v6e/v7x)


def _is_v5e():
    try:
        kind = jax.devices()[0].device_kind.lower()
        return ("v5 lite" in kind) or ("v5e" in kind) or ("v5litepod" in kind)
    except Exception:
        return False


@functools.lru_cache(maxsize=None)
def _buffered_weights_supported():
    """Probe pl.Buffered(1) (single-buffered grid-invariant operands) support."""
    def _probe(x_ref, o_ref):
        o_ref[...] = x_ref[...]
    try:
        fn = pl.pallas_call(
            _probe,
            out_shape=jax.ShapeDtypeStruct((8, 128), jnp.float32),
            grid=(1,),
            in_specs=[pl.BlockSpec((8, 128), lambda i: (0, 0),
                                   pipeline_mode=pl.Buffered(1))],
            out_specs=pl.BlockSpec((8, 128), lambda i: (0, 0)),
        )
        jax.block_until_ready(fn(jnp.zeros((8, 128), jnp.float32)))
        return True
    except Exception:
        return False


# --------------------------------------------------------------------------
# Pallas kernel: 3x3 "same" conv + bias + ReLU over one TH-row band
# --------------------------------------------------------------------------
def _conv3x3_relu_kernel(x_ref, w_ref, b_ref, o_ref, *, TH, W, Cin, Cout,
                         compute_dtype, kh_split, early_cast):
    # x_ref: (1, (TH+4)*W, Cin)  haloed row band: 2 halo rows above/below the TH
    #                            output rows (the outermost halo row is only read
    #                            at positions killed by the column masks),
    #                            flattened as hh*W + w.
    # w_ref: (9*Cin, Cout)       weights, rows ordered (kh, kw, ci), compute_dtype
    # b_ref: (1, Cout)           f32 bias
    # o_ref: (1, TH*W, Cout)     output rows flattened as ho*W + w
    THW = TH * W

    x = x_ref[0]
    if early_cast:                       # bf16 im2col on v6e/v7x; f32 on v5e
        x = x.astype(compute_dtype)

    # Column masks (w-boundary of the 3x3 window), hoisted & broadcast once and
    # reused by every tap (JAX does not CSE broadcast_in_dim).
    col = lax.broadcasted_iota(jnp.int32, (THW, 1), 0)
    wpos = (col & (W - 1)) if (W & (W - 1)) == 0 else jnp.remainder(col, W)
    not_first_col = jnp.broadcast_to(wpos >= 1, (THW, Cin))
    not_last_col = jnp.broadcast_to(wpos <= W - 2, (THW, Cin))

    def tap(dh, dw):
        # Output (ho, w) needs input at haloed row ho + 2 + dh, column w + dw.
        # In flattened coords this is a constant shift, so each tap is a plain
        # static slice of the haloed band (always in-bounds).
        start = (2 + dh) * W + dw
        t = x[start:start + THW, :]
        if dw == -1:
            t = jnp.where(not_first_col, t, jnp.zeros_like(t))
        elif dw == 1:
            t = jnp.where(not_last_col, t, jnp.zeros_like(t))
        return t

    w_all = w_ref[...]
    if kh_split:
        # Three (THW, 3*Cin) slabs, one per kernel row: 3x lower peak slab VMEM,
        # same MXU pass count on the 256-wide v6e/v7x MXU, and the slab-(i+1)
        # build overlaps the slab-i matmul.
        acc = None
        for r, dh in enumerate((-1, 0, 1)):
            slab = jnp.concatenate([tap(dh, dw) for dw in (-1, 0, 1)], axis=1)
            if not early_cast:
                slab = slab.astype(compute_dtype)
            part = jnp.dot(slab, w_all[r * 3 * Cin:(r + 1) * 3 * Cin, :],
                           preferred_element_type=jnp.float32)
            acc = part if acc is None else acc + part
    else:
        # Single K = 9*Cin dot (preferred on v5e's 128-wide MXU).
        patches = jnp.concatenate(
            [tap(dh, dw) for dh in (-1, 0, 1) for dw in (-1, 0, 1)], axis=1)
        if not early_cast:
            patches = patches.astype(compute_dtype)
        acc = jnp.dot(patches, w_all, preferred_element_type=jnp.float32)

    acc = acc + b_ref[...]               # f32 bias
    acc = jnp.maximum(acc, 0.0)          # ReLU (inplace in torch)
    o_ref[0] = acc.astype(o_ref.dtype)


def _per_step_vmem_bytes(TH, W, Cin, Cout, in_item, out_item, c_item,
                         kh_split, early_cast):
    L = (TH + 4) * W
    THW = TH * W
    slab_cols = (3 if kh_split else 9) * Cin
    slab_item = c_item if early_cast else (in_item + c_item)
    return int(2 * L * Cin * in_item            # double-buffered input block
               + 2 * THW * Cout * out_item      # double-buffered output block
               + 9 * Cin * Cout * c_item        # weights (single-buffered)
               + Cout * 4                       # bias
               + (L * Cin * c_item if early_cast else 0)   # cast copy of band
               + THW * slab_cols * slab_item    # im2col slab (peak)
               + THW * Cout * 4                 # f32 accumulator
               + 2 * THW * Cin * 4)             # masks / misc margin


def conv3x3_relu_pallas(x_nhwc, wmat, b, *, compute_dtype=jnp.bfloat16,
                        out_dtype=None):
    """3x3 'same' conv + bias + ReLU.

    x_nhwc: (N,H,W,Cin); wmat: (9*Cin,Cout) in compute_dtype, rows ordered
    (kh,kw,ci); b: (Cout,) f32.  Returns (N,H,W,Cout) in out_dtype.
    """
    N, H, W, Cin = x_nhwc.shape
    K9, Cout = wmat.shape
    assert K9 == 9 * Cin
    if out_dtype is None:
        out_dtype = x_nhwc.dtype

    in_item = jnp.dtype(x_nhwc.dtype).itemsize
    out_item = jnp.dtype(out_dtype).itemsize
    c_item = jnp.dtype(compute_dtype).itemsize

    is_v5e = _is_v5e()
    kh_split = not is_v5e     # 3-slab dots on v6e/v7x; single K=9*Cin dot on v5e
    early_cast = not is_v5e   # bf16 tap/mask math off v5e (no bf16 VALU there)

    capacity = _vmem_capacity_bytes()
    budget = max(int(capacity * 0.45), 8 << 20)

    def est_fn(th):
        return _per_step_vmem_bytes(th, W, Cin, Cout, in_item, out_item, c_item,
                                    kh_split, early_cast)

    # Row tile: largest divisor of H that fits the budget, preferring moderate
    # tiles (<= 4096 rows/step) so the grid has enough steps to keep both v7x
    # TensorCores busy even at batch = 1.
    divisors = [d for d in range(1, H + 1) if H % d == 0]
    fitting = [d for d in divisors if est_fn(d) <= budget]
    if fitting:
        moderate = [d for d in fitting if d * W <= 4096]
        TH = max(moderate) if moderate else min(fitting)
    else:
        TH = 1
    est = est_fn(TH)
    if est > int(capacity * 0.9):
        # TODO(synk): add column (W) tiling for extreme W*Cin; not needed for CARN.
        raise NotImplementedError("a single image row band does not fit VMEM")
    vmem_limit = int(min(max(1.5 * est + (4 << 20), 32 << 20), capacity * 0.9))

    T = H // TH
    THW = TH * W
    L = (TH + 4) * W

    # Host-side halo materialization: pad 2 rows top/bottom, take overlapping
    # (TH+4)-row windows with stride TH.  One cheap XLA copy of the small
    # Cin-channel input; every Pallas block stays non-overlapping and pipelined.
    xp = jnp.pad(x_nhwc, ((0, 0), (2, 2), (0, 0), (0, 0)))
    if T == 1:
        xt = xp[:, None]
    else:
        xt = jnp.stack([xp[:, t * TH:t * TH + TH + 4] for t in range(T)], axis=1)
    xt = xt.reshape(N * T, L, Cin)

    b2 = b.reshape(1, Cout).astype(jnp.float32)

    kernel = functools.partial(
        _conv3x3_relu_kernel, TH=TH, W=W, Cin=Cin, Cout=Cout,
        compute_dtype=compute_dtype, kh_split=kh_split, early_cast=early_cast)

    cost = pl.CostEstimate(
        flops=2 * N * H * W * K9 * Cout,
        transcendentals=0,
        bytes_accessed=(N * T * L * Cin * in_item + K9 * Cout * c_item
                        + Cout * 4 + N * H * W * Cout * out_item))

    if _buffered_weights_supported():
        w_spec = pl.BlockSpec((K9, Cout), lambda i: (0, 0),
                              pipeline_mode=pl.Buffered(1))
        b_spec = pl.BlockSpec((1, Cout), lambda i: (0, 0),
                              pipeline_mode=pl.Buffered(1))
    else:
        w_spec = pl.BlockSpec((K9, Cout), lambda i: (0, 0))
        b_spec = pl.BlockSpec((1, Cout), lambda i: (0, 0))

    # TODO(synk): for small Cout (< 128 lanes, e.g. the tiny demo config) fold row
    # tiles into the output lane dim to avoid masked vst.msk partial stores; real
    # CARN (Cout = 256) is already lane-dense.
    y = pl.pallas_call(
        kernel,
        out_shape=jax.ShapeDtypeStruct((N * T, THW, Cout), out_dtype),
        grid=(N * T,),
        in_specs=[
            pl.BlockSpec((1, L, Cin), lambda i: (i, 0, 0)),
            w_spec,
            b_spec,
        ],
        out_specs=pl.BlockSpec((1, THW, Cout), lambda i: (i, 0, 0)),
        compiler_params=pltpu.CompilerParams(
            dimension_semantics=("parallel",),
            vmem_limit_bytes=vmem_limit),
        cost_estimate=cost,
    )(xt, wmat, b2)
    return y.reshape(N, H, W, Cout)


# --------------------------------------------------------------------------
# Glue: PixelShuffle (depth-to-space) matching torch.nn.PixelShuffle ordering
# --------------------------------------------------------------------------
def pixel_shuffle_nhwc(x, r):
    N, H, W, C = x.shape
    c = C // (r * r)
    x = x.reshape(N, H, W, c, r, r)
    x = x.transpose(0, 1, 4, 2, 5, 3)
    return x.reshape(N, H * r, W * r, c)


def pixel_shuffle_nchw(x, r):
    N, C, H, W = x.shape
    c = C // (r * r)
    x = x.reshape(N, c, r, r, H, W)
    x = x.transpose(0, 1, 4, 2, 5, 3)
    return x.reshape(N, c, H * r, W * r)


# --------------------------------------------------------------------------
# Parameter construction (mirrors nn.Conv2d shapes, groups=1)
# --------------------------------------------------------------------------
def make_upsample_params(key, n_channels, scale):
    """Returns list of (w_oihw, b) conv params and list of shuffle factors.

    multi_scale=True in the original module is a host-side selection of one of
    the per-scale parameter sets at call time; build one set per scale and
    dispatch in Python.
    """
    params, shuffles = [], []
    if scale in (2, 4, 8):
        for _ in range(int(math.log(scale, 2))):
            key, kw_, kb = jax.random.split(key, 3)
            cout = 4 * n_channels
            w = jax.random.normal(kw_, (cout, n_channels, 3, 3), jnp.float32) * 0.1
            b = jax.random.normal(kb, (cout,), jnp.float32) * 0.1
            params.append((w, b))
            shuffles.append(2)
    elif scale == 3:
        key, kw_, kb = jax.random.split(key, 3)
        cout = 9 * n_channels
        w = jax.random.normal(kw_, (cout, n_channels, 3, 3), jnp.float32) * 0.1
        b = jax.random.normal(kb, (cout,), jnp.float32) * 0.1
        params.append((w, b))
        shuffles.append(3)
    else:
        raise ValueError(f"unsupported scale: {scale}")
    return params, shuffles


# --------------------------------------------------------------------------
# Forward pass: UpsampleBlock(multi_scale=False, scale=s).forward(x, s)
# --------------------------------------------------------------------------
def upsample_block_forward(x_nchw, params, shuffles, *,
                           compute_dtype=jnp.bfloat16):
    # Single NCHW -> NHWC transpose on entry; pipeline stays NHWC throughout.
    x = jnp.transpose(x_nchw, (0, 2, 3, 1))
    n_stages = len(params)
    for si, ((w_oihw, bias), r) in enumerate(zip(params, shuffles)):
        cout, cin = w_oihw.shape[0], w_oihw.shape[1]
        # OIHW -> HWIO -> (9*Cin, Cout), matching the kernel's tap ordering.
        wmat = jnp.transpose(w_oihw, (2, 3, 1, 0)).reshape(9 * cin, cout)
        wmat = wmat.astype(compute_dtype)
        # Inter-stage activations are stored in compute_dtype (the next stage
        # casts to it anyway); only the final stage writes the input dtype.
        out_dtype = x_nchw.dtype if si == n_stages - 1 else compute_dtype
        y = conv3x3_relu_pallas(x, wmat, bias, compute_dtype=compute_dtype,
                                out_dtype=out_dtype)
        # TODO(synk): fuse this depth-to-space into the conv kernel's epilogue to
        # drop one HBM round trip of the 4*Cin activation per stage.
        x = pixel_shuffle_nhwc(y, r)
    return jnp.transpose(x, (0, 3, 1, 2))       # single NHWC -> NCHW on exit


# Pure-JAX (XLA) reference with matching bf16-in / f32-accumulate numerics and
# bf16 inter-stage activations.
def upsample_block_reference(x_nchw, params, shuffles, *,
                             compute_dtype=jnp.bfloat16):
    x = x_nchw
    n_stages = len(params)
    for si, ((w_oihw, bias), r) in enumerate(zip(params, shuffles)):
        y = lax.conv_general_dilated(
            x.astype(compute_dtype), w_oihw.astype(compute_dtype),
            window_strides=(1, 1), padding="SAME",
            dimension_numbers=("NCHW", "OIHW", "NCHW"),
            preferred_element_type=jnp.float32)
        y = y + bias.reshape(1, -1, 1, 1)
        y = jnp.maximum(y, 0.0)
        y = y.astype(x_nchw.dtype if si == n_stages - 1 else compute_dtype)
        x = pixel_shuffle_nchw(y, r)
    return x


if __name__ == "__main__":
    key = jax.random.PRNGKey(0)
    key, kx = jax.random.split(key)

    n_channels = 4
    N, H, W = 2, 16, 16
    x = jax.random.normal(kx, (N, n_channels, H, W), jnp.float32)

    # scale=2: one conv+shuffle stage, f32 output end-to-end (strict check).
    params2, shuffles2 = make_upsample_params(key, n_channels, 2)
    fwd2 = jax.jit(lambda xx: upsample_block_forward(xx, params2, shuffles2))
    out2 = jax.block_until_ready(fwd2(x))
    ref2 = upsample_block_reference(x, params2, shuffles2)
    assert out2.shape == (N, n_channels, 2 * H, 2 * W), out2.shape
    assert jnp.allclose(out2, ref2, atol=2e-3, rtol=2e-3), (
        float(jnp.max(jnp.abs(out2 - ref2))))

    # scale=4: two stages; exercises bf16 inter-stage activations + tiling glue.
    params4, shuffles4 = make_upsample_params(key, n_channels, 4)
    fwd4 = jax.jit(lambda xx: upsample_block_forward(xx, params4, shuffles4))
    out4 = jax.block_until_ready(fwd4(x))
    ref4 = upsample_block_reference(x, params4, shuffles4)
    assert out4.shape == (N, n_channels, 4 * H, 4 * W), out4.shape
    assert jnp.allclose(out4, ref4, atol=1e-2, rtol=1e-2), (
        float(jnp.max(jnp.abs(out4 - ref4))))

    print("KERNEL_OK")
</pallas_src>

<mosaic_0001>
module attributes {stable_mosaic.version = 11 : i64} {
  func.func @_conv3x3_relu_kernel(%arg0: i32, %arg1: memref<1x320x4xf32, #tpu.memory_space<vmem>>, %arg2: memref<36x16xbf16, #tpu.memory_space<vmem>>, %arg3: memref<1x16xf32, #tpu.memory_space<vmem>>, %arg4: memref<1x256x16xf32, #tpu.memory_space<vmem>>) attributes {dimension_semantics = [#tpu.dimension_semantics<parallel>], iteration_bounds = array<i64: 2>, scalar_prefetch = 0 : i64, scratch_operands = 0 : i64, tpu.core_type = #tpu.core_type<tc>, window_params = [{transform_indices = @transform_0, window_bounds = array<i64: 1, 320, 4>}, {pipeline_mode = #tpu.pipeline_mode<synchronous>, transform_indices = @transform_1, window_bounds = array<i64: 36, 16>}, {pipeline_mode = #tpu.pipeline_mode<synchronous>, transform_indices = @transform_2, window_bounds = array<i64: 1, 16>}, {transform_indices = @transform_3, window_bounds = array<i64: 1, 256, 16>}]} {
    %c0 = arith.constant 0 : index
    %c0_0 = arith.constant 0 : index
    %c0_1 = arith.constant 0 : index
    %0 = vector.load %arg1[%c0, %c0_0, %c0_1] : memref<1x320x4xf32, #tpu.memory_space<vmem>>, vector<1x320x4xf32>
    %1 = vector.shape_cast %0 : vector<1x320x4xf32> to vector<320x4xf32>
    %2 = arith.truncf %1 : vector<320x4xf32> to vector<320x4xbf16>
    %3 = tpu.iota {dimensions = array<i32: 0>} : vector<256x1xi32>
    %c15_i32 = arith.constant 15 : i32
    %4 = vector.broadcast %c15_i32 : i32 to vector<256x1xi32>
    %5 = arith.andi %3, %4 : vector<256x1xi32>
    %c1_i32 = arith.constant 1 : i32
    %6 = vector.broadcast %c1_i32 : i32 to vector<256x1xi32>
    %7 = arith.cmpi sge, %5, %6 : vector<256x1xi32>
    %8 = vector.shape_cast %7 : vector<256x1xi1> to vector<256x1xi1>
    %9 = vector.broadcast %8 : vector<256x1xi1> to vector<256x4xi1>
    %c14_i32 = arith.constant 14 : i32
    %10 = vector.broadcast %c14_i32 : i32 to vector<256x1xi32>
    %11 = arith.cmpi sle, %5, %10 : vector<256x1xi32>
    %12 = vector.shape_cast %11 : vector<256x1xi1> to vector<256x1xi1>
    %13 = vector.broadcast %12 : vector<256x1xi1> to vector<256x4xi1>
    %c0_2 = arith.constant 0 : index
    %c0_3 = arith.constant 0 : index
    %14 = vector.load %arg2[%c0_2, %c0_3] : memref<36x16xbf16, #tpu.memory_space<vmem>>, vector<36x16xbf16>
    %15 = vector.extract_strided_slice %2 {offsets = [15, 0], sizes = [256, 4], strides = [1, 1]} : vector<320x4xbf16> to vector<256x4xbf16>
    %cst = arith.constant 0.000000e+00 : bf16
    %16 = vector.broadcast %cst : bf16 to vector<256x4xbf16>
    %17 = arith.select %9, %15, %16 : vector<256x4xi1>, vector<256x4xbf16>
    %18 = vector.extract_strided_slice %2 {offsets = [16, 0], sizes = [256, 4], strides = [1, 1]} : vector<320x4xbf16> to vector<256x4xbf16>
    %19 = vector.extract_strided_slice %2 {offsets = [17, 0], sizes = [256, 4], strides = [1, 1]} : vector<320x4xbf16> to vector<256x4xbf16>
    %cst_4 = arith.constant 0.000000e+00 : bf16
    %20 = vector.broadcast %cst_4 : bf16 to vector<256x4xbf16>
    %21 = arith.select %13, %19, %20 : vector<256x4xi1>, vector<256x4xbf16>
    %22 = tpu.concatenate %17, %18, %21 in 1 : vector<256x4xbf16>, vector<256x4xbf16>, vector<256x4xbf16> -> vector<256x12xbf16>
    %23 = vector.extract_strided_slice %14 {offsets = [0, 0], sizes = [12, 16], strides = [1, 1]} : vector<36x16xbf16> to vector<12x16xbf16>
    %cst_5 = arith.constant dense<0.000000e+00> : vector<256x16xf32>
    %24 = tpu.matmul %22, %23, %cst_5 {dimension_numbers = #tpu.dot_dimension_numbers<[1], [0], [0], [1], [0, 0, 1, 1], [], []>} : vector<256x12xbf16>, vector<12x16xbf16>, vector<256x16xf32> -> vector<256x16xf32>
    %25 = vector.extract_strided_slice %2 {offsets = [31, 0], sizes = [256, 4], strides = [1, 1]} : vector<320x4xbf16> to vector<256x4xbf16>
    %cst_6 = arith.constant 0.000000e+00 : bf16
    %26 = vector.broadcast %cst_6 : bf16 to vector<256x4xbf16>
    %27 = arith.select %9, %25, %26 : vector<256x4xi1>, vector<256x4xbf16>
    %28 = vector.extract_strided_slice %2 {offsets = [32, 0], sizes = [256, 4], strides = [1, 1]} : vector<320x4xbf16> to vector<256x4xbf16>
    %29 = vector.extract_strided_slice %2 {offsets = [33, 0], sizes = [256, 4], strides = [1, 1]} : vector<320x4xbf16> to vector<256x4xbf16>
    %cst_7 = arith.constant 0.000000e+00 : bf16
    %30 = vector.broadcast %cst_7 : bf16 to vector<256x4xbf16>
    %31 = arith.select %13, %29, %30 : vector<256x4xi1>, vector<256x4xbf16>
    %32 = tpu.concatenate %27, %28, %31 in 1 : vector<256x4xbf16>, vector<256x4xbf16>, vector<256x4xbf16> -> vector<256x12xbf16>
    %33 = vector.extract_strided_slice %14 {offsets = [12, 0], sizes = [12, 16], strides = [1, 1]} : vector<36x16xbf16> to vector<12x16xbf16>
    %cst_8 = arith.constant dense<0.000000e+00> : vector<256x16xf32>
    %34 = tpu.matmul %32, %33, %cst_8 {dimension_numbers = #tpu.dot_dimension_numbers<[1], [0], [0], [1], [0, 0, 1, 1], [], []>} : vector<256x12xbf16>, vector<12x16xbf16>, vector<256x16xf32> -> vector<256x16xf32>
    %35 = arith.addf %24, %34 : vector<256x16xf32>
    %36 = vector.extract_strided_slice %2 {offsets = [47, 0], sizes = [256, 4], strides = [1, 1]} : vector<320x4xbf16> to vector<256x4xbf16>
    %cst_9 = arith.constant 0.000000e+00 : bf16
    %37 = vector.broadcast %cst_9 : bf16 to vector<256x4xbf16>
    %38 = arith.select %9, %36, %37 : vector<256x4xi1>, vector<256x4xbf16>
    %39 = vector.extract_strided_slice %2 {offsets = [48, 0], sizes = [256, 4], strides = [1, 1]} : vector<320x4xbf16> to vector<256x4xbf16>
    %40 = vector.extract_strided_slice %2 {offsets = [49, 0], sizes = [256, 4], strides = [1, 1]} : vector<320x4xbf16> to vector<256x4xbf16>
    %cst_10 = arith.constant 0.000000e+00 : bf16
    %41 = vector.broadcast %cst_10 : bf16 to vector<256x4xbf16>
    %42 = arith.select %13, %40, %41 : vector<256x4xi1>, vector<256x4xbf16>
    %43 = tpu.concatenate %38, %39, %42 in 1 : vector<256x4xbf16>, vector<256x4xbf16>, vector<256x4xbf16> -> vector<256x12xbf16>
    %44 = vector.extract_strided_slice %14 {offsets = [24, 0], sizes = [12, 16], strides = [1, 1]} : vector<36x16xbf16> to vector<12x16xbf16>
    %cst_11 = arith.constant dense<0.000000e+00> : vector<256x16xf32>
    %45 = tpu.matmul %43, %44, %cst_11 {dimension_numbers = #tpu.dot_dimension_numbers<[1], [0], [0], [1], [0, 0, 1, 1], [], []>} : vector<256x12xbf16>, vector<12x16xbf16>, vector<256x16xf32> -> vector<256x16xf32>
    %46 = arith.addf %35, %45 : vector<256x16xf32>
    %c0_12 = arith.constant 0 : index
    %c0_13 = arith.constant 0 : index
    %47 = vector.load %arg3[%c0_12, %c0_13] : memref<1x16xf32, #tpu.memory_space<vmem>>, vector<1x16xf32>
    %48 = vector.broadcast %47 : vector<1x16xf32> to vector<256x16xf32>
    %49 = arith.addf %46, %48 : vector<256x16xf32>
    %cst_14 = arith.constant 0.000000e+00 : f32
    %50 = vector.broadcast %cst_14 : f32 to vector<256x16xf32>
    %51 = arith.maximumf %49, %50 : vector<256x16xf32>
    %c0_15 = arith.constant 0 : index
    %c0_16 = arith.constant 0 : index
    %c0_17 = arith.constant 0 : index
    %52 = vector.load %arg4[%c0_15, %c0_16, %c0_17] : memref<1x256x16xf32, #tpu.memory_space<vmem>>, vector<1x256x16xf32>
    %53 = vector.shape_cast %52 : vector<1x256x16xf32> to vector<256x16xf32>
    %54 = vector.shape_cast %51 : vector<256x16xf32> to vector<1x256x16xf32>
    tpu.vector_store %arg4[%c0_15, %c0_16, %c0_17], %54 {strides = array<i32>} : memref<1x256x16xf32, #tpu.memory_space<vmem>>, vector<1x256x16xf32>,
    return
  }
  func.func @transform_0(%arg0: i32) -> (i32, i32, i32) {
    %c0_i32 = arith.constant 0 : i32
    %c0_i32_0 = arith.constant 0 : i32
    %c0_i32_1 = arith.constant 0 : i32
    return %arg0, %c0_i32, %c0_i32_0 : i32, i32, i32
  }
  func.func @transform_1(%arg0: i32) -> (i32, i32) {
    %c0_i32 = arith.constant 0 : i32
    %c0_i32_0 = arith.constant 0 : i32
    %c0_i32_1 = arith.constant 0 : i32
    return %c0_i32, %c0_i32_0 : i32, i32
  }
  func.func @transform_2(%arg0: i32) -> (i32, i32) {
    %c0_i32 = arith.constant 0 : i32
    %c0_i32_0 = arith.constant 0 : i32
    %c0_i32_1 = arith.constant 0 : i32
    return %c0_i32, %c0_i32_0 : i32, i32
  }
  func.func @transform_3(%arg0: i32) -> (i32, i32, i32) {
    %c0_i32 = arith.constant 0 : i32
    %c0_i32_0 = arith.constant 0 : i32
    %c0_i32_1 = arith.constant 0 : i32
    return %arg0, %c0_i32, %c0_i32_0 : i32, i32, i32
  }
}

</mosaic_0001>

<llo_original>
// kernel: _lambda_.1
$region0: #{_lambda_.1}
  #allocation0 [shape = 'u32[]', space=smem, size = 0x4, offset = 0x4, fixed_abs, tag = 'smem constant byte address 0x4 - core index']
  #allocation1 [shape = 'u32[144,128]{1,0:T(1,128)}', space=vmem, size = 0x12000, scoped, tag = 'internal scratch']
  %s0 = inlined_call_operand.vmem [shape: f32[2,320,4], index: 0, kind: input, shape index: {}]
  %s1 = inlined_call_operand.vmem [shape: bf16[36,16], index: 1, kind: input, shape index: {}]
  %s2 = inlined_call_operand.vmem [shape: f32[1,16], index: 2, kind: input, shape index: {}]
  %s3 = inlined_call_operand.vmem [shape: f32[2,256,16], index: 3, kind: output, shape index: {}]
  %s4 = sld [smem:[#allocation0]]
  $region45: #{_lambda_.1} parent=0
    _
  %s6 = ssub.s32 1, %s4
  %s7 = scalar_select 0, %s6, %s4
  loop: start=0, step=1, limit=4
  $region2: #{_lambda_.1} parent=0 // loop_pre_header
    _
  $region3: #{_lambda_.1} parent=0 // loop_header
    %s9 = sphi 0, %s13
    %p10 = scmp.ge.s32.totalorder %s9, 4
    %s19 = sphi 0, %s21
    %s22 = sphi 0, %s19
    %s23 = sphi 0, %s22
    %s39 = sphi 0, %s23
    %s43 = sphi 0, %s43
    %s45 = sphi 0, %s43
    %s46 = sphi 0, %s45
    %s60 = sphi 0, %s46
    %s64 = sphi 0, %s64
    %s66 = sphi 0, %s64
    %s67 = sphi 0, %s66
    %s81 = sphi 0, %s67
    %s87 = sphi 0, %s89
    %s90 = sphi 0, %s87
    %s91 = sphi 0, %s90
    %s107 = sphi 0, %s91
  $region4: #{_lambda_.1} parent=0 // loop_header_branch
    %12 = sbr.rel (%p10) target = $region8
  $region5: #{_lambda_.1} parent=0 // loop_body
    %s14 = ssub.s32 %s9, 1
    %s15 = ssub.s32 %s9, 2
    %s16 = sadd.s32 %s9, 1
    %s17 = ssub.s32 %s9, %s16
    %p18 = scmp.eq.s32.totalorder %s17, 0
    %s20 = sadd.s32 %s19, 1
    %s21 = scalar_select %p18, %s19, %s20
    %p24 = pneg %p18
    %p25 = scmp.eq.s32.totalorder %s9, 1
    %p26 = por %p24, %p25
    %p27 = scmp.ne.s32.totalorder %s19, %s22
    %p28 = scmp.eq.s32.totalorder %s9, 0
    %p29 = por %p27, %p28
    %p30 = scmp.ne.s32.totalorder %s19, %s22
    %p31 = scmp.eq.s32.totalorder %s14, 1
    %p32 = por %p30, %p31
    %p33 = scmp.ne.s32.totalorder %s22, %s23
    %p34 = scmp.eq.s32.totalorder %s14, 0
    %p35 = por %p33, %p34
    %p36 = scmp.ne.s32.totalorder %s22, %s23
    %p37 = scmp.eq.s32.totalorder %s15, 1
    %p38 = por %p36, %p37
    %p40 = scmp.ne.s32.totalorder %s23, %s39
    %p41 = scmp.eq.s32.totalorder %s15, 0
    %p42 = por %p40, %p41
    %s44 = sadd.s32 %s43, 1
    %p47 = scmp.eq.s32.totalorder %s9, 1
    %p48 = scmp.ne.s32.totalorder %s43, %s45
    %p49 = scmp.eq.s32.totalorder %s9, 0
    %p50 = por %p48, %p49
    %p51 = scmp.ne.s32.totalorder %s43, %s45
    %p52 = scmp.eq.s32.totalorder %s14, 1
    %p53 = por %p51, %p52
    %p54 = scmp.ne.s32.totalorder %s45, %s46
    %p55 = scmp.eq.s32.totalorder %s14, 0
    %p56 = por %p54, %p55
    %p57 = scmp.ne.s32.totalorder %s45, %s46
    %p58 = scmp.eq.s32.totalorder %s15, 1
    %p59 = por %p57, %p58
    %p61 = scmp.ne.s32.totalorder %s46, %s60
    %p62 = scmp.eq.s32.totalorder %s15, 0
    %p63 = por %p61, %p62
    %s65 = sadd.s32 %s64, 1
    %p68 = scmp.eq.s32.totalorder %s9, 1
    %p69 = scmp.ne.s32.totalorder %s64, %s66
    %p70 = scmp.eq.s32.totalorder %s9, 0
    %p71 = por %p69, %p70
    %p72 = scmp.ne.s32.totalorder %s64, %s66
    %p73 = scmp.eq.s32.totalorder %s14, 1
    %p74 = por %p72, %p73
    %p75 = scmp.ne.s32.totalorder %s66, %s67
    %p76 = scmp.eq.s32.totalorder %s14, 0
    %p77 = por %p75, %p76
    %p78 = scmp.ne.s32.totalorder %s66, %s67
    %p79 = scmp.eq.s32.totalorder %s15, 1
    %p80 = por %p78, %p79
    %p82 = scmp.ne.s32.totalorder %s67, %s81
    %p83 = scmp.eq.s32.totalorder %s15, 0
    %p84 = por %p82, %p83
    %s85 = ssub.s32 %s9, %s16
    %p86 = scmp.eq.s32.totalorder %s85, 0
    %s88 = sadd.s32 %s87, 1
    %s89 = scalar_select %p86, %s87, %s88
    %p92 = pneg %p86
    %p93 = scmp.eq.s32.totalorder %s9, 1
    %p94 = por %p92, %p93
    %p95 = scmp.ne.s32.totalorder %s87, %s90
    %p96 = scmp.eq.s32.totalorder %s9, 0
    %p97 = por %p95, %p96
    %p98 = scmp.ne.s32.totalorder %s87, %s90
    %p99 = scmp.eq.s32.totalorder %s14, 1
    %p100 = por %p98, %p99
    %p101 = scmp.ne.s32.totalorder %s90, %s91
    %p102 = scmp.eq.s32.totalorder %s14, 0
    %p103 = por %p101, %p102
    %p104 = scmp.ne.s32.totalorder %s90, %s91
    %p105 = scmp.eq.s32.totalorder %s15, 1
    %p106 = por %p104, %p105
    %p108 = scmp.ne.s32.totalorder %s91, %s107
    %p109 = scmp.eq.s32.totalorder %s15, 0
    %p110 = por %p108, %p109
    %p111 = scmp.le.s32.totalorder 1, %s9
    %p112 = scmp.lt.s32.totalorder %s9, 3
    %p113 = pnand %p111, %p112
    %p114 = pneg %p113
    // Predicated region
    $region9: #{_lambda_.1} parent=5 // pred_check
      _
    $region10: #{_lambda_.1} parent=5 // pred_check_branch
      %116 = sbr.rel (%p113) target = $region12
    $region11: #{_lambda_.1} parent=5 // pred_region
      %s117 = ssub.s32 %s9, 1
      // Predicated region
      $region13: #{_lambda_.1} parent=11 // pred_check
        %p118 = pneg %p56
      $region14: #{_lambda_.1} parent=11 // pred_check_branch
        %120 = sbr.rel (%p118) target = $region16
      $region15: #{_lambda_.1} parent=11 // pred_region
        _
      $region16: #{_lambda_.1} parent=11 // pred_fallthru
        _
      // Predicated region
      $region17: #{_lambda_.1} parent=11 // pred_check
        %p121 = pneg %p77
      $region18: #{_lambda_.1} parent=11 // pred_check_branch
        %123 = sbr.rel (%p121) target = $region20
      $region19: #{_lambda_.1} parent=11 // pred_region
        _
      $region20: #{_lambda_.1} parent=11 // pred_fallthru
        _
    $region12: #{_lambda_.1} parent=5 // pred_fallthru
      _
    %p124 = scmp.lt.s32.totalorder %s9, 2
    // Predicated region
    $region21: #{_lambda_.1} parent=5 // pred_check
      %p125 = pneg %p124
    $region22: #{_lambda_.1} parent=5 // pred_check_branch
      %127 = sbr.rel (%p125) target = $region24
    $region23: #{_lambda_.1} parent=5 // pred_region
      // Predicated region
      $region25: #{_lambda_.1} parent=23 // pred_check
        %p128 = pneg %p29
      $region26: #{_lambda_.1} parent=23 // pred_check_branch
        %130 = sbr.rel (%p128) target = $region28
      $region27: #{_lambda_.1} parent=23 // pred_region
        %p131 = scmp.lt.s32.totalorder %s9, 1
        %s132 = scalar_select %p131, %s9, 1
        %s133 = smul.addr %s132, 40
        %s134 = smul.addr %s133, 8
        %s135 = scalar_lea.vmem %s0, %s134
      $region28: #{_lambda_.1} parent=23 // pred_fallthru
        _
    $region24: #{_lambda_.1} parent=5 // pred_fallthru
      _
    %p136 = scmp.le.s32.totalorder 1, %s9
    %p137 = scmp.lt.s32.totalorder %s9, 3
    %p138 = pnand %p136, %p137
    %p139 = pneg %p138
    // Predicated region
    $region29: #{_lambda_.1} parent=5 // pred_check
      _
    $region30: #{_lambda_.1} parent=5 // pred_check_branch
      %141 = sbr.rel (%p138) target = $region32
    $region31: #{_lambda_.1} parent=5 // pred_region
      %s142 = ssub.s32 %s9, 1
      %p143 = scmp.lt.s32.totalorder %s14, 1
      %s144 = scalar_select %p143, %s14, 1
      %s145 = smul.addr %s144, 40
      %s146 = smul.addr %s145, 8
      %s147 = scalar_lea.vmem %s0, %s146
      %p148 = pneg %p35
      %p149 = pneg %p32
      %p150 = pneg %p56
      %p151 = pneg %p53
      %p152 = pneg %p77
      %p153 = pneg %p74
      %p154 = pneg %p103
      %p155 = pneg %p100
      %p156 = scmp.lt.s32.totalorder %s14, 1
      %s157 = scalar_select %p156, %s14, 1
      %s158 = smul.addr %s157, 32
      %s159 = smul.addr %s158, 8
      %s160 = scalar_lea.vmem %s3, %s159
      %p161 = scmp.lt.s32.totalorder %s14, 1
      %s162 = scalar_select %p161, %s14, 1
      %s163 = smul.addr %s162, 40
      %s164 = smul.addr %s163, 8
      %s165 = scalar_lea.vmem %s0, %s164
      %p166 = scmp.lt.s32.totalorder %s14, 1
      %s167 = scalar_select %p166, %s14, 1
      %s168 = smul.addr %s167, 32
      %s169 = smul.addr %s168, 8
      %s170 = scalar_lea.vmem %s3, %s169
      %v174 = vld [vmem:[%s165] sm:$0xff]
      %v175 = vld [vmem:[%s165 + $0x8] sm:$0xff]
      %v176 = vld [vmem:[%s165 + $0x10] sm:$0xff]
      %v177 = vld [vmem:[%s165 + $0x18] sm:$0xff]
      %v178 = vld [vmem:[%s165 + $0x20] sm:$0xff]
      %v179 = vld [vmem:[%s165 + $0x28] sm:$0xff]
      %v180 = vld [vmem:[%s165 + $0x30] sm:$0xff]
      %v181 = vld [vmem:[%s165 + $0x38] sm:$0xff]
      %v182 = vld [vmem:[%s165 + $0x40] sm:$0xff]
      %v183 = vld [vmem:[%s165 + $0x48] sm:$0xff]
      %v184 = vld [vmem:[%s165 + $0x50] sm:$0xff]
      %v185 = vld [vmem:[%s165 + $0x58] sm:$0xff]
      %v186 = vld [vmem:[%s165 + $0x60] sm:$0xff]
      %v187 = vld [vmem:[%s165 + $0x68] sm:$0xff]
      %v188 = vld [vmem:[%s165 + $0x70] sm:$0xff]
      %v189 = vld [vmem:[%s165 + $0x78] sm:$0xff]
      %v190 = vld [vmem:[%s165 + $0x80] sm:$0xff]
      %v191 = vld [vmem:[%s165 + $0x88] sm:$0xff]
      %v192 = vld [vmem:[%s165 + $0x90] sm:$0xff]
      %v193 = vld [vmem:[%s165 + $0x98] sm:$0xff]
      %v194 = vld [vmem:[%s165 + $0xa0] sm:$0xff]
      %v195 = vld [vmem:[%s165 + $0xa8] sm:$0xff]
      %v196 = vld [vmem:[%s165 + $0xb0] sm:$0xff]
      %v197 = vld [vmem:[%s165 + $0xb8] sm:$0xff]
      %v198 = vld [vmem:[%s165 + $0xc0] sm:$0xff]
      %v199 = vld [vmem:[%s165 + $0xc8] sm:$0xff]
      %v200 = vld [vmem:[%s165 + $0xd0] sm:$0xff]
      %v201 = vld [vmem:[%s165 + $0xd8] sm:$0xff]
      %v202 = vld [vmem:[%s165 + $0xe0] sm:$0xff]
      %v203 = vld [vmem:[%s165 + $0xe8] sm:$0xff]
      %v204 = vld [vmem:[%s165 + $0xf0] sm:$0xff]
      %v205 = vld [vmem:[%s165 + $0xf8] sm:$0xff]
      %v206 = vld [vmem:[%s165 + $0x100] sm:$0xff]
      %v207 = vld [vmem:[%s165 + $0x108] sm:$0xff]
      %v208 = vld [vmem:[%s165 + $0x110] sm:$0xff]
      %v209 = vld [vmem:[%s165 + $0x118] sm:$0xff]
      %v210 = vld [vmem:[%s165 + $0x120] sm:$0xff]
      %v211 = vld [vmem:[%s165 + $0x128] sm:$0xff]
      %v212 = vld [vmem:[%s165 + $0x130] sm:$0xff]
      %v213 = vld [vmem:[%s165 + $0x138] sm:$0xff]
      %v214 = vpack.c.bf16 %v175, %v174
      %v215 = vpack.c.bf16 %v177, %v176
      %v216 = vpack.c.bf16 %v179, %v178
      %v217 = vpack.c.bf16 %v181, %v180
      %v218 = vpack.c.bf16 %v183, %v182
      %v219 = vpack.c.bf16 %v185, %v184
      %v220 = vpack.c.bf16 %v187, %v186
      %v221 = vpack.c.bf16 %v189, %v188
      %v222 = vpack.c.bf16 %v191, %v190
      %v223 = vpack.c.bf16 %v193, %v192
      %v224 = vpack.c.bf16 %v195, %v194
      %v225 = vpack.c.bf16 %v197, %v196
      %v226 = vpack.c.bf16 %v199, %v198
      %v227 = vpack.c.bf16 %v201, %v200
      %v228 = vpack.c.bf16 %v203, %v202
      %v229 = vpack.c.bf16 %v205, %v204
      %v230 = vpack.c.bf16 %v207, %v206
      %v231 = vpack.c.bf16 %v209, %v208
      %v232 = vpack.c.bf16 %v211, %v210
      %v233 = vpack.c.bf16 %v213, %v212
      %v234 = vlaneseq
      %v235 = vshrl.u32 %v234, 7
      %v236 = vadd.s32 %v235, 8
      %v237 = vadd.s32 %v235, 16
      %v238 = vadd.s32 %v235, 24
      %v239 = vadd.s32 %v235, 32
      %v240 = vadd.s32 %v235, 40
      %v241 = vadd.s32 %v235, 48
      %v242 = vadd.s32 %v235, 56
      %v243 = vadd.s32 %v235, 64
      %v244 = vadd.s32 %v235, 72
      %v245 = vadd.s32 %v235, 80
      %v246 = vadd.s32 %v235, 88
      %v247 = vadd.s32 %v235, 96
      %v248 = vadd.s32 %v235, 104
      %v249 = vadd.s32 %v235, 112
      %v250 = vadd.s32 %v235, 120
      %v251 = vadd.s32 %v235, 128
      %v252 = vadd.s32 %v235, 136
      %v253 = vadd.s32 %v235, 144
      %v254 = vadd.s32 %v235, 152
      %v255 = vadd.s32 %v235, 160
      %v256 = vadd.s32 %v235, 168
      %v257 = vadd.s32 %v235, 176
      %v258 = vadd.s32 %v235, 184
      %v259 = vadd.s32 %v235, 192
      %v260 = vadd.s32 %v235, 200
      %v261 = vadd.s32 %v235, 208
      %v262 = vadd.s32 %v235, 216
      %v263 = vadd.s32 %v235, 224
      %v264 = vadd.s32 %v235, 232
      %v265 = vadd.s32 %v235, 240
      %v266 = vadd.s32 %v235, 248
      %v267 = vand.u32 %v235, 15
      %v268 = vand.u32 %v236, 15
      %v269 = vand.u32 %v237, 15
      %v270 = vand.u32 %v238, 15
      %v271 = vand.u32 %v239, 15
      %v272 = vand.u32 %v240, 15
      %v273 = vand.u32 %v241, 15
      %v274 = vand.u32 %v242, 15
      %v275 = vand.u32 %v243, 15
      %v276 = vand.u32 %v244, 15
      %v277 = vand.u32 %v245, 15
      %v278 = vand.u32 %v246, 15
      %v279 = vand.u32 %v247, 15
      %v280 = vand.u32 %v248, 15
      %v281 = vand.u32 %v249, 15
      %v282 = vand.u32 %v250, 15
      %v283 = vand.u32 %v251, 15
      %v284 = vand.u32 %v252, 15
      %v285 = vand.u32 %v253, 15
      %v286 = vand.u32 %v254, 15
      %v287 = vand.u32 %v255, 15
      %v288 = vand.u32 %v256, 15
      %v289 = vand.u32 %v257, 15
      %v290 = vand.u32 %v258, 15
      %v291 = vand.u32 %v259, 15
      %v292 = vand.u32 %v260, 15
      %v293 = vand.u32 %v261, 15
      %v294 = vand.u32 %v262, 15
      %v295 = vand.u32 %v263, 15
      %v296 = vand.u32 %v264, 15
      %v297 = vand.u32 %v265, 15
      %v298 = vand.u32 %v266, 15
      %vm299 = vcmp.ge.s32.totalorder %v267, 1
      %vm300 = vcmp.ge.s32.totalorder %v268, 1
      %vm301 = vcmp.ge.s32.totalorder %v269, 1
      %vm302 = vcmp.ge.s32.totalorder %v270, 1
      %vm303 = vcmp.ge.s32.totalorder %v271, 1
      %vm304 = vcmp.ge.s32.totalorder %v272, 1
      %vm305 = vcmp.ge.s32.totalorder %v273, 1
      %vm306 = vcmp.ge.s32.totalorder %v274, 1
      %vm307 = vcmp.ge.s32.totalorder %v275, 1
      %vm308 = vcmp.ge.s32.totalorder %v276, 1
      %vm309 = vcmp.ge.s32.totalorder %v277, 1
      %vm310 = vcmp.ge.s32.totalorder %v278, 1
      %vm311 = vcmp.ge.s32.totalorder %v279, 1
      %vm312 = vcmp.ge.s32.totalorder %v280, 1
      %vm313 = vcmp.ge.s32.totalorder %v281, 1
      %vm314 = vcmp.ge.s32.totalorder %v282, 1
      %vm315 = vcmp.ge.s32.totalorder %v283, 1
      %vm316 = vcmp.ge.s32.totalorder %v284, 1
      %vm317 = vcmp.ge.s32.totalorder %v285, 1
      %vm318 = vcmp.ge.s32.totalorder %v286, 1
      %vm319 = vcmp.ge.s32.totalorder %v287, 1
      %vm320 = vcmp.ge.s32.totalorder %v288, 1
      %vm321 = vcmp.ge.s32.totalorder %v289, 1
      %vm322 = vcmp.ge.s32.totalorder %v290, 1
      %vm323 = vcmp.ge.s32.totalorder %v291, 1
      %vm324 = vcmp.ge.s32.totalorder %v292, 1
      %vm325 = vcmp.ge.s32.totalorder %v293, 1
      %vm326 = vcmp.ge.s32.totalorder %v294, 1
      %vm327 = vcmp.ge.s32.totalorder %v295, 1
      %vm328 = vcmp.ge.s32.totalorder %v296, 1
      %vm329 = vcmp.ge.s32.totalorder %v297, 1
      %vm330 = vcmp.ge.s32.totalorder %v298, 1
      %v331 = vsel %vm299, 1, 0
      %v332 = vsel %vm300, 1, 0
      %v333 = vsel %vm301, 1, 0
      %v334 = vsel %vm302, 1, 0
      %v335 = vsel %vm303, 1, 0
      %v336 = vsel %vm304, 1, 0
      %v337 = vsel %vm305, 1, 0
      %v338 = vsel %vm306, 1, 0
      %v339 = vsel %vm307, 1, 0
      %v340 = vsel %vm308, 1, 0
      %v341 = vsel %vm309, 1, 0
      %v342 = vsel %vm310, 1, 0
      %v343 = vsel %vm311, 1, 0
      %v344 = vsel %vm312, 1, 0
      %v345 = vsel %vm313, 1, 0
      %v346 = vsel %vm314, 1, 0
      %v347 = vsel %vm315, 1, 0
      %v348 = vsel %vm316, 1, 0
      %v349 = vsel %vm317, 1, 0
      %v350 = vsel %vm318, 1, 0
      %v351 = vsel %vm319, 1, 0
      %v352 = vsel %vm320, 1, 0
      %v353 = vsel %vm321, 1, 0
      %v354 = vsel %vm322, 1, 0
      %v355 = vsel %vm323, 1, 0
      %v356 = vsel %vm324, 1, 0
      %v357 = vsel %vm325, 1, 0
      %v358 = vsel %vm326, 1, 0
      %v359 = vsel %vm327, 1, 0
      %v360 = vsel %vm328, 1, 0
      %v361 = vsel %vm329, 1, 0
      %v362 = vsel %vm330, 1, 0
      %vm363 = vcmp.eq.s32.totalorder %v331, 1
      %vm364 = vcmp.eq.s32.totalorder %v332, 1
      %vm365 = vcmp.eq.s32.totalorder %v333, 1
      %vm366 = vcmp.eq.s32.totalorder %v334, 1
      %vm367 = vcmp.eq.s32.totalorder %v335, 1
      %vm368 = vcmp.eq.s32.totalorder %v336, 1
      %vm369 = vcmp.eq.s32.totalorder %v337, 1
      %vm370 = vcmp.eq.s32.totalorder %v338, 1
      %vm371 = vcmp.eq.s32.totalorder %v339, 1
      %vm372 = vcmp.eq.s32.totalorder %v340, 1
      %vm373 = vcmp.eq.s32.totalorder %v341, 1
      %vm374 = vcmp.eq.s32.totalorder %v342, 1
      %vm375 = vcmp.eq.s32.totalorder %v343, 1
      %vm376 = vcmp.eq.s32.totalorder %v344, 1
      %vm377 = vcmp.eq.s32.totalorder %v345, 1
      %vm378 = vcmp.eq.s32.totalorder %v346, 1
      %vm379 = vcmp.eq.s32.totalorder %v347, 1
      %vm380 = vcmp.eq.s32.totalorder %v348, 1
      %vm381 = vcmp.eq.s32.totalorder %v349, 1
      %vm382 = vcmp.eq.s32.totalorder %v350, 1
      %vm383 = vcmp.eq.s32.totalorder %v351, 1
      %vm384 = vcmp.eq.s32.totalorder %v352, 1
      %vm385 = vcmp.eq.s32.totalorder %v353, 1
      %vm386 = vcmp.eq.s32.totalorder %v354, 1
      %vm387 = vcmp.eq.s32.totalorder %v355, 1
      %vm388 = vcmp.eq.s32.totalorder %v356, 1
      %vm389 = vcmp.eq.s32.totalorder %v357, 1
      %vm390 = vcmp.eq.s32.totalorder %v358, 1
      %vm391 = vcmp.eq.s32.totalorder %v359, 1
      %vm392 = vcmp.eq.s32.totalorder %v360, 1
      %vm393 = vcmp.eq.s32.totalorder %v361, 1
      %vm394 = vcmp.eq.s32.totalorder %v362, 1
      %vm395 = vcmp.le.s32.totalorder %v267, 14
      %vm396 = vcmp.le.s32.totalorder %v268, 14
      %vm397 = vcmp.le.s32.totalorder %v269, 14
      %vm398 = vcmp.le.s32.totalorder %v270, 14
      %vm399 = vcmp.le.s32.totalorder %v271, 14
      %vm400 = vcmp.le.s32.totalorder %v272, 14
      %vm401 = vcmp.le.s32.totalorder %v273, 14
      %vm402 = vcmp.le.s32.totalorder %v274, 14
      %vm403 = vcmp.le.s32.totalorder %v275, 14
      %vm404 = vcmp.le.s32.totalorder %v276, 14
      %vm405 = vcmp.le.s32.totalorder %v277, 14
      %vm406 = vcmp.le.s32.totalorder %v278, 14
      %vm407 = vcmp.le.s32.totalorder %v279, 14
      %vm408 = vcmp.le.s32.totalorder %v280, 14
      %vm409 = vcmp.le.s32.totalorder %v281, 14
      %vm410 = vcmp.le.s32.totalorder %v282, 14
      %vm411 = vcmp.le.s32.totalorder %v283, 14
      %vm412 = vcmp.le.s32.totalorder %v284, 14
      %vm413 = vcmp.le.s32.totalorder %v285, 14
      %vm414 = vcmp.le.s32.totalorder %v286, 14
      %vm415 = vcmp.le.s32.totalorder %v287, 14
      %vm416 = vcmp.le.s32.totalorder %v288, 14
      %vm417 = vcmp.le.s32.totalorder %v289, 14
      %vm418 = vcmp.le.s32.totalorder %v290, 14
      %vm419 = vcmp.le.s32.totalorder %v291, 14
      %vm420 = vcmp.le.s32.totalorder %v292, 14
      %vm421 = vcmp.le.s32.totalorder %v293, 14
      %vm422 = vcmp.le.s32.totalorder %v294, 14
      %vm423 = vcmp.le.s32.totalorder %v295, 14
      %vm424 = vcmp.le.s32.totalorder %v296, 14
      %vm425 = vcmp.le.s32.totalorder %v297, 14
      %vm426 = vcmp.le.s32.totalorder %v298, 14
      %v427 = vsel %vm395, 1, 0
      %v428 = vsel %vm396, 1, 0
      %v429 = vsel %vm397, 1, 0
      %v430 = vsel %vm398, 1, 0
      %v431 = vsel %vm399, 1, 0
      %v432 = vsel %vm400, 1, 0
      %v433 = vsel %vm401, 1, 0
      %v434 = vsel %vm402, 1, 0
      %v435 = vsel %vm403, 1, 0
      %v436 = vsel %vm404, 1, 0
      %v437 = vsel %vm405, 1, 0
      %v438 = vsel %vm406, 1, 0
      %v439 = vsel %vm407, 1, 0
      %v440 = vsel %vm408, 1, 0
      %v441 = vsel %vm409, 1, 0
      %v442 = vsel %vm410, 1, 0
      %v443 = vsel %vm411, 1, 0
      %v444 = vsel %vm412, 1, 0
      %v445 = vsel %vm413, 1, 0
      %v446 = vsel %vm414, 1, 0
      %v447 = vsel %vm415, 1, 0
      %v448 = vsel %vm416, 1, 0
      %v449 = vsel %vm417, 1, 0
      %v450 = vsel %vm418, 1, 0
      %v451 = vsel %vm419, 1, 0
      %v452 = vsel %vm420, 1, 0
      %v453 = vsel %vm421, 1, 0
      %v454 = vsel %vm422, 1, 0
      %v455 = vsel %vm423, 1, 0
      %v456 = vsel %vm424, 1, 0
      %v457 = vsel %vm425, 1, 0
      %v458 = vsel %vm426, 1, 0
      %vm459 = vcmp.eq.s32.totalorder %v427, 1
      %vm460 = vcmp.eq.s32.totalorder %v428, 1
      %vm461 = vcmp.eq.s32.totalorder %v429, 1
      %vm462 = vcmp.eq.s32.totalorder %v430, 1
      %vm463 = vcmp.eq.s32.totalorder %v431, 1
      %vm464 = vcmp.eq.s32.totalorder %v432, 1
      %vm465 = vcmp.eq.s32.totalorder %v433, 1
      %vm466 = vcmp.eq.s32.totalorder %v434, 1
      %vm467 = vcmp.eq.s32.totalorder %v435, 1
      %vm468 = vcmp.eq.s32.totalorder %v436, 1
      %vm469 = vcmp.eq.s32.totalorder %v437, 1
      %vm470 = vcmp.eq.s32.totalorder %v438, 1
      %vm471 = vcmp.eq.s32.totalorder %v439, 1
      %vm472 = vcmp.eq.s32.totalorder %v440, 1
      %vm473 = vcmp.eq.s32.totalorder %v441, 1
      %vm474 = vcmp.eq.s32.totalorder %v442, 1
      %vm475 = vcmp.eq.s32.totalorder %v443, 1
      %vm476 = vcmp.eq.s32.totalorder %v444, 1
      %vm477 = vcmp.eq.s32.totalorder %v445, 1
      %vm478 = vcmp.eq.s32.totalorder %v446, 1
      %vm479 = vcmp.eq.s32.totalorder %v447, 1
      %vm480 = vcmp.eq.s32.totalorder %v448, 1
      %vm481 = vcmp.eq.s32.totalorder %v449, 1
      %vm482 = vcmp.eq.s32.totalorder %v450, 1
      %vm483 = vcmp.eq.s32.totalorder %v451, 1
      %vm484 = vcmp.eq.s32.totalorder %v452, 1
      %vm485 = vcmp.eq.s32.totalorder %v453, 1
      %vm486 = vcmp.eq.s32.totalorder %v454, 1
      %vm487 = vcmp.eq.s32.totalorder %v455, 1
      %vm488 = vcmp.eq.s32.totalorder %v456, 1
      %vm489 = vcmp.eq.s32.totalorder %v457, 1
      %vm490 = vcmp.eq.s32.totalorder %v458, 1
      %v491 = vld [vmem:[%s1] sm:$0xf]
      %v492 = vld [vmem:[%s1 + $0x4] sm:$0xf]
      %v493 = vld [vmem:[%s1 + $0x8] sm:$0xf]
      %v494 = vld [vmem:[%s1 + $0xc] sm:$0xf]
      %v495 = vld [vmem:[%s1 + $0x10] sm:$0x3]
      %vm496 = vmpackc.low %vm363, %vm363
      %vm497 = vmpackc.low %vm364, %vm364
      %vm498 = vmpackc.low %vm365, %vm365
      %vm499 = vmpackc.low %vm366, %vm366
      %vm500 = vmpackc.low %vm367, %vm367
      %vm501 = vmpackc.low %vm368, %vm368
      %vm502 = vmpackc.low %vm369, %vm369
      %vm503 = vmpackc.low %vm370, %vm370
      %vm504 = vmpackc.low %vm371, %vm371
      %vm505 = vmpackc.low %vm372, %vm372
      %vm506 = vmpackc.low %vm373, %vm373
      %vm507 = vmpackc.low %vm374, %vm374
      %vm508 = vmpackc.low %vm375, %vm375
      %vm509 = vmpackc.low %vm376, %vm376
      %vm510 = vmpackc.low %vm377, %vm377
      %vm511 = vmpackc.low %vm378, %vm378
      %vm512 = vmpackc.low %vm379, %vm379
      %vm513 = vmpackc.low %vm380, %vm380
      %vm514 = vmpackc.low %vm381, %vm381
      %vm515 = vmpackc.low %vm382, %vm382
      %vm516 = vmpackc.low %vm383, %vm383
      %vm517 = vmpackc.low %vm384, %vm384
      %vm518 = vmpackc.low %vm385, %vm385
      %vm519 = vmpackc.low %vm386, %vm386
      %vm520 = vmpackc.low %vm387, %vm387
      %vm521 = vmpackc.low %vm388, %vm388
      %vm522 = vmpackc.low %vm389, %vm389
      %vm523 = vmpackc.low %vm390, %vm390
      %vm524 = vmpackc.low %vm391, %vm391
      %vm525 = vmpackc.low %vm392, %vm392
      %vm526 = vmpackc.low %vm393, %vm393
      %vm527 = vmpackc.low %vm394, %vm394
      %v528 = vsel %vm496, 65537, 0
      %v529 = vsel %vm497, 65537, 0
      %v530 = vsel %vm498, 65537, 0
      %v531 = vsel %vm499, 65537, 0
      %v532 = vsel %vm500, 65537, 0
      %v533 = vsel %vm501, 65537, 0
      %v534 = vsel %vm502, 65537, 0
      %v535 = vsel %vm503, 65537, 0
      %v536 = vsel %vm504, 65537, 0
      %v537 = vsel %vm505, 65537, 0
      %v538 = vsel %vm506, 65537, 0
      %v539 = vsel %vm507, 65537, 0
      %v540 = vsel %vm508, 65537, 0
      %v541 = vsel %vm509, 65537, 0
      %v542 = vsel %vm510, 65537, 0
      %v543 = vsel %vm511, 65537, 0
      %v544 = vsel %vm512, 65537, 0
      %v545 = vsel %vm513, 65537, 0
      %v546 = vsel %vm514, 65537, 0
      %v547 = vsel %vm515, 65537, 0
      %v548 = vsel %vm516, 65537, 0
      %v549 = vsel %vm517, 65537, 0
      %v550 = vsel %vm518, 65537, 0
      %v551 = vsel %vm519, 65537, 0
      %v552 = vsel %vm520, 65537, 0
      %v553 = vsel %vm521, 65537, 0
      %v554 = vsel %vm522, 65537, 0
      %v555 = vsel %vm523, 65537, 0
      %v556 = vsel %vm524, 65537, 0
      %v557 = vsel %vm525, 65537, 0
      %v558 = vsel %vm526, 65537, 0
      %v559 = vsel %vm527, 65537, 0
      %v560 = vunpack.c.l.b16 %v528
      %v561 = vunpack.c.l.b16 %v529
      %v562 = vunpack.c.l.b16 %v530
      %v563 = vunpack.c.l.b16 %v531
      %v564 = vunpack.c.l.b16 %v532
      %v565 = vunpack.c.l.b16 %v533
      %v566 = vunpack.c.l.b16 %v534
      %v567 = vunpack.c.l.b16 %v535
      %v568 = vunpack.c.l.b16 %v536
      %v569 = vunpack.c.l.b16 %v537
      %v570 = vunpack.c.l.b16 %v538
      %v571 = vunpack.c.l.b16 %v539
      %v572 = vunpack.c.l.b16 %v540
      %v573 = vunpack.c.l.b16 %v541
      %v574 = vunpack.c.l.b16 %v542
      %v575 = vunpack.c.l.b16 %v543
      %v576 = vunpack.c.l.b16 %v544
      %v577 = vunpack.c.l.b16 %v545
      %v578 = vunpack.c.l.b16 %v546
      %v579 = vunpack.c.l.b16 %v547
      %v580 = vunpack.c.l.b16 %v548
      %v581 = vunpack.c.l.b16 %v549
      %v582 = vunpack.c.l.b16 %v550
      %v583 = vunpack.c.l.b16 %v551
      %v584 = vunpack.c.l.b16 %v552
      %v585 = vunpack.c.l.b16 %v553
      %v586 = vunpack.c.l.b16 %v554
      %v587 = vunpack.c.l.b16 %v555
      %v588 = vunpack.c.l.b16 %v556
      %v589 = vunpack.c.l.b16 %v557
      %v590 = vunpack.c.l.b16 %v558
      %v591 = vunpack.c.l.b16 %v559
      %v592 = vpack.c.b16 %v561, %v560
      %v593 = vpack.c.b16 %v563, %v562
      %v594 = vpack.c.b16 %v565, %v564
      %v595 = vpack.c.b16 %v567, %v566
      %v596 = vpack.c.b16 %v569, %v568
      %v597 = vpack.c.b16 %v571, %v570
      %v598 = vpack.c.b16 %v573, %v572
      %v599 = vpack.c.b16 %v575, %v574
      %v600 = vpack.c.b16 %v577, %v576
      %v601 = vpack.c.b16 %v579, %v578
      %v602 = vpack.c.b16 %v581, %v580
      %v603 = vpack.c.b16 %v583, %v582
      %v604 = vpack.c.b16 %v585, %v584
      %v605 = vpack.c.b16 %v587, %v586
      %v606 = vpack.c.b16 %v589, %v588
      %v607 = vpack.c.b16 %v591, %v590
      %vm608 = vsmask.f32 7424
      %v610 = vshll.u32 %v592, 16
      %v612 = vrot.slane %v610, 1
      %v613 = vshrl.u32 %v592, 16
      %v615 = vor.u32 %v613, %v612
      %v617 = vshll.u32 %v593, 16
      %v619 = vrot.slane %v617, 1
      %v620 = vsel %vm608, %v615, %v619
      %v621 = vshrl.u32 %v593, 16
      %v623 = vor.u32 %v621, %v619
      %v625 = vshll.u32 %v594, 16
      %v627 = vrot.slane %v625, 1
      %v628 = vsel %vm608, %v623, %v627
      %v629 = vshrl.u32 %v594, 16
      %v631 = vor.u32 %v629, %v627
      %v633 = vshll.u32 %v595, 16
      %v635 = vrot.slane %v633, 1
      %v636 = vsel %vm608, %v631, %v635
      %v637 = vshrl.u32 %v595, 16
      %v639 = vor.u32 %v637, %v635
      %v641 = vshll.u32 %v596, 16
      %v643 = vrot.slane %v641, 1
      %v644 = vsel %vm608, %v639, %v643
      %v645 = vshrl.u32 %v596, 16
      %v647 = vor.u32 %v645, %v643
      %v649 = vshll.u32 %v597, 16
      %v651 = vrot.slane %v649, 1
      %v652 = vsel %vm608, %v647, %v651
      %v653 = vshrl.u32 %v597, 16
      %v655 = vor.u32 %v653, %v651
      %v657 = vshll.u32 %v598, 16
      %v659 = vrot.slane %v657, 1
      %v660 = vsel %vm608, %v655, %v659
      %v661 = vshrl.u32 %v598, 16
      %v663 = vor.u32 %v661, %v659
      %v665 = vshll.u32 %v599, 16
      %v667 = vrot.slane %v665, 1
      %v668 = vsel %vm608, %v663, %v667
      %v669 = vshrl.u32 %v599, 16
      %v671 = vor.u32 %v669, %v667
      %v673 = vshll.u32 %v600, 16
      %v675 = vrot.slane %v673, 1
      %v676 = vsel %vm608, %v671, %v675
      %v677 = vshrl.u32 %v600, 16
      %v679 = vor.u32 %v677, %v675
      %v681 = vshll.u32 %v601, 16
      %v683 = vrot.slane %v681, 1
      %v684 = vsel %vm608, %v679, %v683
      %v685 = vshrl.u32 %v601, 16
      %v687 = vor.u32 %v685, %v683
      %v689 = vshll.u32 %v602, 16
      %v691 = vrot.slane %v689, 1
      %v692 = vsel %vm608, %v687, %v691
      %v693 = vshrl.u32 %v602, 16
      %v695 = vor.u32 %v693, %v691
      %v697 = vshll.u32 %v603, 16
      %v699 = vrot.slane %v697, 1
      %v700 = vsel %vm608, %v695, %v699
      %v701 = vshrl.u32 %v603, 16
      %v703 = vor.u32 %v701, %v699
      %v705 = vshll.u32 %v604, 16
      %v707 = vrot.slane %v705, 1
      %v708 = vsel %vm608, %v703, %v707
      %v709 = vshrl.u32 %v604, 16
      %v711 = vor.u32 %v709, %v707
      %v713 = vshll.u32 %v605, 16
      %v715 = vrot.slane %v713, 1
      %v716 = vsel %vm608, %v711, %v715
      %v717 = vshrl.u32 %v605, 16
      %v719 = vor.u32 %v717, %v715
      %v721 = vshll.u32 %v606, 16
      %v723 = vrot.slane %v721, 1
      %v724 = vsel %vm608, %v719, %v723
      %v725 = vshrl.u32 %v606, 16
      %v727 = vor.u32 %v725, %v723
      %v729 = vshll.u32 %v607, 16
      %v731 = vrot.slane %v729, 1
      %v732 = vsel %vm608, %v727, %v731
      %v733 = vshrl.u32 %v607, 16
      %v735 = vor.u32 %v733, %v731
      %vm736 = vcmp.ne.s16.totalorder %v612, 0
      %vm737 = vcmp.ne.s16.totalorder %v620, 0
      %vm738 = vcmp.ne.s16.totalorder %v628, 0
      %vm739 = vcmp.ne.s16.totalorder %v636, 0
      %vm740 = vcmp.ne.s16.totalorder %v644, 0
      %vm741 = vcmp.ne.s16.totalorder %v652, 0
      %vm742 = vcmp.ne.s16.totalorder %v660, 0
      %vm743 = vcmp.ne.s16.totalorder %v668, 0
      %vm744 = vcmp.ne.s16.totalorder %v676, 0
      %vm745 = vcmp.ne.s16.totalorder %v684, 0
      %vm746 = vcmp.ne.s16.totalorder %v692, 0
      %vm747 = vcmp.ne.s16.totalorder %v700, 0
      %vm748 = vcmp.ne.s16.totalorder %v708, 0
      %vm749 = vcmp.ne.s16.totalorder %v716, 0
      %vm750 = vcmp.ne.s16.totalorder %v724, 0
      %vm751 = vcmp.ne.s16.totalorder %v732, 0
      %vm752 = vcmp.ne.s16.totalorder %v735, 0
      %v753 = vsel %vm736, %v214, 0
      %v754 = vsel %vm737, %v215, 0
      %v755 = vsel %vm738, %v216, 0
      %v756 = vsel %vm739, %v217, 0
      %v757 = vsel %vm740, %v218, 0
      %v758 = vsel %vm741, %v219, 0
      %v759 = vsel %vm742, %v220, 0
      %v760 = vsel %vm743, %v221, 0
      %v761 = vsel %vm744, %v222, 0
      %v762 = vsel %vm745, %v223, 0
      %v763 = vsel %vm746, %v224, 0
      %v764 = vsel %vm747, %v225, 0
      %v765 = vsel %vm748, %v226, 0
      %v766 = vsel %vm749, %v227, 0
      %v767 = vsel %vm750, %v228, 0
      %v768 = vsel %vm751, %v229, 0
      %v769 = vsel %vm752, %v230, 0
      %vm770 = vmpackc.low %vm459, %vm459
      %vm771 = vmpackc.low %vm460, %vm460
      %vm772 = vmpackc.low %vm461, %vm461
      %vm773 = vmpackc.low %vm462, %vm462
      %vm774 = vmpackc.low %vm463, %vm463
      %vm775 = vmpackc.low %vm464, %vm464
      %vm776 = vmpackc.low %vm465, %vm465
      %vm777 = vmpackc.low %vm466, %vm466
      %vm778 = vmpackc.low %vm467, %vm467
      %vm779 = vmpackc.low %vm468, %vm468
      %vm780 = vmpackc.low %vm469, %vm469
      %vm781 = vmpackc.low %vm470, %vm470
      %vm782 = vmpackc.low %vm471, %vm471
      %vm783 = vmpackc.low %vm472, %vm472
      %vm784 = vmpackc.low %vm473, %vm473
      %vm785 = vmpackc.low %vm474, %vm474
      %vm786 = vmpackc.low %vm475, %vm475
      %vm787 = vmpackc.low %vm476, %vm476
      %vm788 = vmpackc.low %vm477, %vm477
      %vm789 = vmpackc.low %vm478, %vm478
      %vm790 = vmpackc.low %vm479, %vm479
      %vm791 = vmpackc.low %vm480, %vm480
      %vm792 = vmpackc.low %vm481, %vm481
      %vm793 = vmpackc.low %vm482, %vm482
      %vm794 = vmpackc.low %vm483, %vm483
      %vm795 = vmpackc.low %vm484, %vm484
      %vm796 = vmpackc.low %vm485, %vm485
      %vm797 = vmpackc.low %vm486, %vm486
      %vm798 = vmpackc.low %vm487, %vm487
      %vm799 = vmpackc.low %vm488, %vm488
      %vm800 = vmpackc.low %vm489, %vm489
      %vm801 = vmpackc.low %vm490, %vm490
      %v802 = vsel %vm770, 65537, 0
      %v803 = vsel %vm771, 65537, 0
      %v804 = vsel %vm772, 65537, 0
      %v805 = vsel %vm773, 65537, 0
      %v806 = vsel %vm774, 65537, 0
      %v807 = vsel %vm775, 65537, 0
      %v808 = vsel %vm776, 65537, 0
      %v809 = vsel %vm777, 65537, 0
      %v810 = vsel %vm778, 65537, 0
      %v811 = vsel %vm779, 65537, 0
      %v812 = vsel %vm780, 65537, 0
      %v813 = vsel %vm781, 65537, 0
      %v814 = vsel %vm782, 65537, 0
      %v815 = vsel %vm783, 65537, 0
      %v816 = vsel %vm784, 65537, 0
      %v817 = vsel %vm785, 65537, 0
      %v818 = vsel %vm786, 65537, 0
      %v819 = vsel %vm787, 65537, 0
      %v820 = vsel %vm788, 65537, 0
      %v821 = vsel %vm789, 65537, 0
      %v822 = vsel %vm790, 65537, 0
      %v823 = vsel %vm791, 65537, 0
      %v824 = vsel %vm792, 65537, 0
      %v825 = vsel %vm793, 65537, 0
      %v826 = vsel %vm794, 65537, 0
      %v827 = vsel %vm795, 65537, 0
      %v828 = vsel %vm796, 65537, 0
      %v829 = vsel %vm797, 65537, 0
      %v830 = vsel %vm798, 65537, 0
      %v831 = vsel %vm799, 65537, 0
      %v832 = vsel %vm800, 65537, 0
      %v833 = vsel %vm801, 65537, 0
      %v834 = vunpack.c.l.b16 %v802
      %v835 = vunpack.c.l.b16 %v803
      %v836 = vunpack.c.l.b16 %v804
      %v837 = vunpack.c.l.b16 %v805
      %v838 = vunpack.c.l.b16 %v806
      %v839 = vunpack.c.l.b16 %v807
      %v840 = vunpack.c.l.b16 %v808
      %v841 = vunpack.c.l.b16 %v809
      %v842 = vunpack.c.l.b16 %v810
      %v843 = vunpack.c.l.b16 %v811
      %v844 = vunpack.c.l.b16 %v812
      %v845 = vunpack.c.l.b16 %v813
      %v846 = vunpack.c.l.b16 %v814
      %v847 = vunpack.c.l.b16 %v815
      %v848 = vunpack.c.l.b16 %v816
      %v849 = vunpack.c.l.b16 %v817
      %v850 = vunpack.c.l.b16 %v818
      %v851 = vunpack.c.l.b16 %v819
      %v852 = vunpack.c.l.b16 %v820
      %v853 = vunpack.c.l.b16 %v821
      %v854 = vunpack.c.l.b16 %v822
      %v855 = vunpack.c.l.b16 %v823
      %v856 = vunpack.c.l.b16 %v824
      %v857 = vunpack.c.l.b16 %v825
      %v858 = vunpack.c.l.b16 %v826
      %v859 = vunpack.c.l.b16 %v827
      %v860 = vunpack.c.l.b16 %v828
      %v861 = vunpack.c.l.b16 %v829
      %v862 = vunpack.c.l.b16 %v830
      %v863 = vunpack.c.l.b16 %v831
      %v864 = vunpack.c.l.b16 %v832
      %v865 = vunpack.c.l.b16 %v833
      %v866 = vpack.c.b16 %v835, %v834
      %v867 = vpack.c.b16 %v837, %v836
      %v868 = vpack.c.b16 %v839, %v838
      %v869 = vpack.c.b16 %v841, %v840
      %v870 = vpack.c.b16 %v843, %v842
      %v871 = vpack.c.b16 %v845, %v844
      %v872 = vpack.c.b16 %v847, %v846
      %v873 = vpack.c.b16 %v849, %v848
      %v874 = vpack.c.b16 %v851, %v850
      %v875 = vpack.c.b16 %v853, %v852
      %v876 = vpack.c.b16 %v855, %v854
      %v877 = vpack.c.b16 %v857, %v856
      %v878 = vpack.c.b16 %v859, %v858
      %v879 = vpack.c.b16 %v861, %v860
      %v880 = vpack.c.b16 %v863, %v862
      %v881 = vpack.c.b16 %v865, %v864
      %vm882 = vsmask.f32 256
      %v884 = vshrl.u32 %v866, 16
      %v886 = vrot.slane %v884, 7
      %v887 = vshll.u32 %v866, 16
      %v889 = vor.u32 %v886, %v887
      %v891 = vshrl.u32 %v867, 16
      %v893 = vrot.slane %v891, 7
      %v894 = vshll.u32 %v867, 16
      %v896 = vor.u32 %v893, %v894
      %v897 = vsel %vm882, %v886, %v896
      %v899 = vshrl.u32 %v868, 16
      %v901 = vrot.slane %v899, 7
      %v902 = vshll.u32 %v868, 16
      %v904 = vor.u32 %v901, %v902
      %v905 = vsel %vm882, %v893, %v904
      %v907 = vshrl.u32 %v869, 16
      %v909 = vrot.slane %v907, 7
      %v910 = vshll.u32 %v869, 16
      %v912 = vor.u32 %v909, %v910
      %v913 = vsel %vm882, %v901, %v912
      %v915 = vshrl.u32 %v870, 16
      %v917 = vrot.slane %v915, 7
      %v918 = vshll.u32 %v870, 16
      %v920 = vor.u32 %v917, %v918
      %v921 = vsel %vm882, %v909, %v920
      %v923 = vshrl.u32 %v871, 16
      %v925 = vrot.slane %v923, 7
      %v926 = vshll.u32 %v871, 16
      %v928 = vor.u32 %v925, %v926
      %v929 = vsel %vm882, %v917, %v928
      %v931 = vshrl.u32 %v872, 16
      %v933 = vrot.slane %v931, 7
      %v934 = vshll.u32 %v872, 16
      %v936 = vor.u32 %v933, %v934
      %v937 = vsel %vm882, %v925, %v936
      %v939 = vshrl.u32 %v873, 16
      %v941 = vrot.slane %v939, 7
      %v942 = vshll.u32 %v873, 16
      %v944 = vor.u32 %v941, %v942
      %v945 = vsel %vm882, %v933, %v944
      %v947 = vshrl.u32 %v874, 16
      %v949 = vrot.slane %v947, 7
      %v950 = vshll.u32 %v874, 16
      %v952 = vor.u32 %v949, %v950
      %v953 = vsel %vm882, %v941, %v952
      %v955 = vshrl.u32 %v875, 16
      %v957 = vrot.slane %v955, 7
      %v958 = vshll.u32 %v875, 16
      %v960 = vor.u32 %v957, %v958
      %v961 = vsel %vm882, %v949, %v960
      %v963 = vshrl.u32 %v876, 16
      %v965 = vrot.slane %v963, 7
      %v966 = vshll.u32 %v876, 16
      %v968 = vor.u32 %v965, %v966
      %v969 = vsel %vm882, %v957, %v968
      %v971 = vshrl.u32 %v877, 16
      %v973 = vrot.slane %v971, 7
      %v974 = vshll.u32 %v877, 16
      %v976 = vor.u32 %v973, %v974
      %v977 = vsel %vm882, %v965, %v976
      %v979 = vshrl.u32 %v878, 16
      %v981 = vrot.slane %v979, 7
      %v982 = vshll.u32 %v878, 16
      %v984 = vor.u32 %v981, %v982
      %v985 = vsel %vm882, %v973, %v984
      %v987 = vshrl.u32 %v879, 16
      %v989 = vrot.slane %v987, 7
      %v990 = vshll.u32 %v879, 16
      %v992 = vor.u32 %v989, %v990
      %v993 = vsel %vm882, %v981, %v992
      %v995 = vshrl.u32 %v880, 16
      %v997 = vrot.slane %v995, 7
      %v998 = vshll.u32 %v880, 16
      %v1000 = vor.u32 %v997, %v998
      %v1001 = vsel %vm882, %v989, %v1000
      %v1003 = vshrl.u32 %v881, 16
      %v1005 = vrot.slane %v1003, 7
      %v1006 = vshll.u32 %v881, 16
      %v1008 = vor.u32 %v1005, %v1006
      %v1009 = vsel %vm882, %v997, %v1008
      %vm1010 = vcmp.ne.s16.totalorder %v889, 0
      %vm1011 = vcmp.ne.s16.totalorder %v897, 0
      %vm1012 = vcmp.ne.s16.totalorder %v905, 0
      %vm1013 = vcmp.ne.s16.totalorder %v913, 0
      %vm1014 = vcmp.ne.s16.totalorder %v921, 0
      %vm1015 = vcmp.ne.s16.totalorder %v929, 0
      %vm1016 = vcmp.ne.s16.totalorder %v937, 0
      %vm1017 = vcmp.ne.s16.totalorder %v945, 0
      %vm1018 = vcmp.ne.s16.totalorder %v953, 0
      %vm1019 = vcmp.ne.s16.totalorder %v961, 0
      %vm1020 = vcmp.ne.s16.totalorder %v969, 0
      %vm1021 = vcmp.ne.s16.totalorder %v977, 0
      %vm1022 = vcmp.ne.s16.totalorder %v985, 0
      %vm1023 = vcmp.ne.s16.totalorder %v993, 0
      %vm1024 = vcmp.ne.s16.totalorder %v1001, 0
      %vm1025 = vcmp.ne.s16.totalorder %v1009, 0
      %vm1026 = vcmp.ne.s16.totalorder %v1005, 0
      %v1027 = vsel %vm1010, %v215, 0
      %v1028 = vsel %vm1011, %v216, 0
      %v1029 = vsel %vm1012, %v217, 0
      %v1030 = vsel %vm1013, %v218, 0
      %v1031 = vsel %vm1014, %v219, 0
      %v1032 = vsel %vm1015, %v220, 0
      %v1033 = vsel %vm1016, %v221, 0
      %v1034 = vsel %vm1017, %v222, 0
      %v1035 = vsel %vm1018, %v223, 0
      %v1036 = vsel %vm1019, %v224, 0
      %v1037 = vsel %vm1020, %v225, 0
      %v1038 = vsel %vm1021, %v226, 0
      %v1039 = vsel %vm1022, %v227, 0
      %v1040 = vsel %vm1023, %v228, 0
      %v1041 = vsel %vm1024, %v229, 0
      %v1042 = vsel %vm1025, %v230, 0
      %v1043 = vsel %vm1026, %v231, 0
      %v1045 = vshll.u32 %v215, 16
      %v1047 = vrot.slane %v1045, 1
      %v1048 = vshrl.u32 %v215, 16
      %v1050 = vor.u32 %v1048, %v1047
      %v1052 = vshll.u32 %v216, 16
      %v1054 = vrot.slane %v1052, 1
      %v1055 = vsel %vm608, %v1050, %v1054
      %v1056 = vshrl.u32 %v216, 16
      %v1058 = vor.u32 %v1056, %v1054
      %v1060 = vshll.u32 %v217, 16
      %v1062 = vrot.slane %v1060, 1
      %v1063 = vsel %vm608, %v1058, %v1062
      %v1064 = vshrl.u32 %v217, 16
      %v1066 = vor.u32 %v1064, %v1062
      %v1068 = vshll.u32 %v218, 16
      %v1070 = vrot.slane %v1068, 1
      %v1071 = vsel %vm608, %v1066, %v1070
      %v1072 = vshrl.u32 %v218, 16
      %v1074 = vor.u32 %v1072, %v1070
      %v1076 = vshll.u32 %v219, 16
      %v1078 = vrot.slane %v1076, 1
      %v1079 = vsel %vm608, %v1074, %v1078
      %v1080 = vshrl.u32 %v219, 16
      %v1082 = vor.u32 %v1080, %v1078
      %v1084 = vshll.u32 %v220, 16
      %v1086 = vrot.slane %v1084, 1
      %v1087 = vsel %vm608, %v1082, %v1086
      %v1088 = vshrl.u32 %v220, 16
      %v1090 = vor.u32 %v1088, %v1086
      %v1092 = vshll.u32 %v221, 16
      %v1094 = vrot.slane %v1092, 1
      %v1095 = vsel %vm608, %v1090, %v1094
      %v1096 = vshrl.u32 %v221, 16
      %v1098 = vor.u32 %v1096, %v1094
      %v1100 = vshll.u32 %v222, 16
      %v1102 = vrot.slane %v1100, 1
      %v1103 = vsel %vm608, %v1098, %v1102
      %v1104 = vshrl.u32 %v222, 16
      %v1106 = vor.u32 %v1104, %v1102
      %v1108 = vshll.u32 %v223, 16
      %v1110 = vrot.slane %v1108, 1
      %v1111 = vsel %vm608, %v1106, %v1110
      %v1112 = vshrl.u32 %v223, 16
      %v1114 = vor.u32 %v1112, %v1110
      %v1116 = vshll.u32 %v224, 16
      %v1118 = vrot.slane %v1116, 1
      %v1119 = vsel %vm608, %v1114, %v1118
      %v1120 = vshrl.u32 %v224, 16
      %v1122 = vor.u32 %v1120, %v1118
      %v1124 = vshll.u32 %v225, 16
      %v1126 = vrot.slane %v1124, 1
      %v1127 = vsel %vm608, %v1122, %v1126
      %v1128 = vshrl.u32 %v225, 16
      %v1130 = vor.u32 %v1128, %v1126
      %v1132 = vshll.u32 %v226, 16
      %v1134 = vrot.slane %v1132, 1
      %v1135 = vsel %vm608, %v1130, %v1134
      %v1136 = vshrl.u32 %v226, 16
      %v1138 = vor.u32 %v1136, %v1134
      %v1140 = vshll.u32 %v227, 16
      %v1142 = vrot.slane %v1140, 1
      %v1143 = vsel %vm608, %v1138, %v1142
      %v1144 = vshrl.u32 %v227, 16
      %v1146 = vor.u32 %v1144, %v1142
      %v1148 = vshll.u32 %v228, 16
      %v1150 = vrot.slane %v1148, 1
      %v1151 = vsel %vm608, %v1146, %v1150
      %v1152 = vshrl.u32 %v228, 16
      %v1154 = vor.u32 %v1152, %v1150
      %v1156 = vshll.u32 %v229, 16
      %v1158 = vrot.slane %v1156, 1
      %v1159 = vsel %vm608, %v1154, %v1158
      %v1160 = vshrl.u32 %v229, 16
      %v1162 = vor.u32 %v1160, %v1158
      %v1164 = vshll.u32 %v230, 16
      %v1166 = vrot.slane %v1164, 1
      %v1167 = vsel %vm608, %v1162, %v1166
      %v1168 = vshrl.u32 %v230, 16
      %v1170 = vor.u32 %v1168, %v1166
      %1171 = vrot.lane.b32.xlu0 %v1047, 4
      %v1172 = vpop.permute.xlu0 %1171
      %1173 = vrot.lane.b32.xlu0 %v1055, 4
      %v1174 = vpop.permute.xlu0 %1173
      %1175 = vrot.lane.b32.xlu0 %v1063, 4
      %v1176 = vpop.permute.xlu0 %1175
      %1177 = vrot.lane.b32.xlu0 %v1071, 4
      %v1178 = vpop.permute.xlu0 %1177
      %1179 = vrot.lane.b32.xlu0 %v1079, 4
      %v1180 = vpop.permute.xlu0 %1179
      %1181 = vrot.lane.b32.xlu0 %v1087, 4
      %v1182 = vpop.permute.xlu0 %1181
      %1183 = vrot.lane.b32.xlu0 %v1095, 4
      %v1184 = vpop.permute.xlu0 %1183
      %1185 = vrot.lane.b32.xlu0 %v1103, 4
      %v1186 = vpop.permute.xlu0 %1185
      %1187 = vrot.lane.b32.xlu0 %v1111, 4
      %v1188 = vpop.permute.xlu0 %1187
      %1189 = vrot.lane.b32.xlu0 %v1119, 4
      %v1190 = vpop.permute.xlu0 %1189
      %1191 = vrot.lane.b32.xlu0 %v1127, 4
      %v1192 = vpop.permute.xlu0 %1191
      %1193 = vrot.lane.b32.xlu0 %v1135, 4
      %v1194 = vpop.permute.xlu0 %1193
      %1195 = vrot.lane.b32.xlu0 %v1143, 4
      %v1196 = vpop.permute.xlu0 %1195
      %1197 = vrot.lane.b32.xlu0 %v1151, 4
      %v1198 = vpop.permute.xlu0 %1197
      %1199 = vrot.lane.b32.xlu0 %v1159, 4
      %v1200 = vpop.permute.xlu0 %1199
      %1201 = vrot.lane.b32.xlu0 %v1167, 4
      %v1202 = vpop.permute.xlu0 %1201
      %1203 = vrot.lane.b32.xlu0 %v1170, 4
      %v1204 = vpop.permute.xlu0 %1203
      %vm1222 = vcmask 1046528
      %v1223 = vrot.slane %v1027, 1
      %v1224 = vrot.slane %v1028, 1
      %v1225 = vsel %vm1222, %v1223, %v1224
      %v1226 = vrot.slane %v1029, 1
      %v1227 = vsel %vm1222, %v1224, %v1226
      %v1228 = vrot.slane %v1030, 1
      %v1229 = vsel %vm1222, %v1226, %v1228
      %v1230 = vrot.slane %v1031, 1
      %v1231 = vsel %vm1222, %v1228, %v1230
      %v1232 = vrot.slane %v1032, 1
      %v1233 = vsel %vm1222, %v1230, %v1232
      %v1234 = vrot.slane %v1033, 1
      %v1235 = vsel %vm1222, %v1232, %v1234
      %v1236 = vrot.slane %v1034, 1
      %v1237 = vsel %vm1222, %v1234, %v1236
      %v1238 = vrot.slane %v1035, 1
      %v1239 = vsel %vm1222, %v1236, %v1238
      %v1240 = vrot.slane %v1036, 1
      %v1241 = vsel %vm1222, %v1238, %v1240
      %v1242 = vrot.slane %v1037, 1
      %v1243 = vsel %vm1222, %v1240, %v1242
      %v1244 = vrot.slane %v1038, 1
      %v1245 = vsel %vm1222, %v1242, %v1244
      %v1246 = vrot.slane %v1039, 1
      %v1247 = vsel %vm1222, %v1244, %v1246
      %v1248 = vrot.slane %v1040, 1
      %v1249 = vsel %vm1222, %v1246, %v1248
      %v1250 = vrot.slane %v1041, 1
      %v1251 = vsel %vm1222, %v1248, %v1250
      %v1252 = vrot.slane %v1042, 1
      %v1253 = vsel %vm1222, %v1250, %v1252
      %v1254 = vrot.slane %v1043, 1
      %v1255 = vsel %vm1222, %v1252, %v1254
      %1256 = vrot.lane.b32.xlu0 %v1223, 8
      %v1257 = vpop.permute.xlu0 %1256
      %1258 = vrot.lane.b32.xlu0 %v1225, 8
      %v1259 = vpop.permute.xlu0 %1258
      %1260 = vrot.lane.b32.xlu0 %v1227, 8
      %v1261 = vpop.permute.xlu0 %1260
      %1262 = vrot.lane.b32.xlu0 %v1229, 8
      %v1263 = vpop.permute.xlu0 %1262
      %1264 = vrot.lane.b32.xlu0 %v1231, 8
      %v1265 = vpop.permute.xlu0 %1264
      %1266 = vrot.lane.b32.xlu0 %v1233, 8
      %v1267 = vpop.permute.xlu0 %1266
      %1268 = vrot.lane.b32.xlu0 %v1235, 8
      %v1269 = vpop.permute.xlu0 %1268
      %1270 = vrot.lane.b32.xlu0 %v1237, 8
      %v1271 = vpop.permute.xlu0 %1270
      %1272 = vrot.lane.b32.xlu0 %v1239, 8
      %v1273 = vpop.permute.xlu0 %1272
      %1274 = vrot.lane.b32.xlu0 %v1241, 8
      %v1275 = vpop.permute.xlu0 %1274
      %1276 = vrot.lane.b32.xlu0 %v1243, 8
      %v1277 = vpop.permute.xlu0 %1276
      %1278 = vrot.lane.b32.xlu0 %v1245, 8
      %v1279 = vpop.permute.xlu0 %1278
      %1280 = vrot.lane.b32.xlu0 %v1247, 8
      %v1281 = vpop.permute.xlu0 %1280
      %1282 = vrot.lane.b32.xlu0 %v1249, 8
      %v1283 = vpop.permute.xlu0 %1282
      %1284 = vrot.lane.b32.xlu0 %v1251, 8
      %v1285 = vpop.permute.xlu0 %1284
      %1286 = vrot.lane.b32.xlu0 %v1253, 8
      %v1287 = vpop.permute.xlu0 %1286
      %1288 = vrot.lane.b32.xlu0 %v1255, 8
      %v1289 = vpop.permute.xlu0 %1288
      %vm1290 = vcmask 31744
      %v1293 = vsel %vm1290, %v753, %v1172
      %v1296 = vsel %vm1290, %v754, %v1174
      %v1299 = vsel %vm1290, %v755, %v1176
      %v1302 = vsel %vm1290, %v756, %v1178
      %v1305 = vsel %vm1290, %v757, %v1180
      %v1308 = vsel %vm1290, %v758, %v1182
      %v1311 = vsel %vm1290, %v759, %v1184
      %v1314 = vsel %vm1290, %v760, %v1186
      %v1317 = vsel %vm1290, %v761, %v1188
      %v1320 = vsel %vm1290, %v762, %v1190
      %v1323 = vsel %vm1290, %v763, %v1192
      %v1326 = vsel %vm1290, %v764, %v1194
      %v1329 = vsel %vm1290, %v765, %v1196
      %v1332 = vsel %vm1290, %v766, %v1198
      %v1335 = vsel %vm1290, %v767, %v1200
      %v1338 = vsel %vm1290, %v768, %v1202
      %v1341 = vsel %vm1290, %v769, %v1204
      %vm1342 = vcmask 64512
      %v1344 = vsel %vm1342, %v1293, %v1257
      %v1346 = vsel %vm1342, %v1296, %v1259
      %v1348 = vsel %vm1342, %v1299, %v1261
      %v1350 = vsel %vm1342, %v1302, %v1263
      %v1352 = vsel %vm1342, %v1305, %v1265
      %v1354 = vsel %vm1342, %v1308, %v1267
      %v1356 = vsel %vm1342, %v1311, %v1269
      %v1358 = vsel %vm1342, %v1314, %v1271
      %v1360 = vsel %vm1342, %v1317, %v1273
      %v1362 = vsel %vm1342, %v1320, %v1275
      %v1364 = vsel %vm1342, %v1323, %v1277
      %v1366 = vsel %vm1342, %v1326, %v1279
      %v1368 = vsel %vm1342, %v1329, %v1281
      %v1370 = vsel %vm1342, %v1332, %v1283
      %v1372 = vsel %vm1342, %v1335, %v1285
      %v1374 = vsel %vm1342, %v1338, %v1287
      %v1376 = vsel %vm1342, %v1341, %v1289
      %v1377 = vsel %vm736, %v215, 0
      %v1378 = vsel %vm737, %v216, 0
      %v1379 = vsel %vm738, %v217, 0
      %v1380 = vsel %vm739, %v218, 0
      %v1381 = vsel %vm740, %v219, 0
      %v1382 = vsel %vm741, %v220, 0
      %v1383 = vsel %vm742, %v221, 0
      %v1384 = vsel %vm743, %v222, 0
      %v1385 = vsel %vm744, %v223, 0
      %v1386 = vsel %vm745, %v224, 0
      %v1387 = vsel %vm746, %v225, 0
      %v1388 = vsel %vm747, %v226, 0
      %v1389 = vsel %vm748, %v227, 0
      %v1390 = vsel %vm749, %v228, 0
      %v1391 = vsel %vm750, %v229, 0
      %v1392 = vsel %vm751, %v230, 0
      %v1393 = vsel %vm752, %v231, 0
      %v1394 = vsel %vm1010, %v216, 0
      %v1395 = vsel %vm1011, %v217, 0
      %v1396 = vsel %vm1012, %v218, 0
      %v1397 = vsel %vm1013, %v219, 0
      %v1398 = vsel %vm1014, %v220, 0
      %v1399 = vsel %vm1015, %v221, 0
      %v1400 = vsel %vm1016, %v222, 0
      %v1401 = vsel %vm1017, %v223, 0
      %v1402 = vsel %vm1018, %v224, 0
      %v1403 = vsel %vm1019, %v225, 0
      %v1404 = vsel %vm1020, %v226, 0
      %v1405 = vsel %vm1021, %v227, 0
      %v1406 = vsel %vm1022, %v228, 0
      %v1407 = vsel %vm1023, %v229, 0
      %v1408 = vsel %vm1024, %v230, 0
      %v1409 = vsel %vm1025, %v231, 0
      %v1410 = vsel %vm1026, %v232, 0
      %v1412 = vshll.u32 %v231, 16
      %v1414 = vrot.slane %v1412, 1
      %v1415 = vsel %vm608, %v1170, %v1414
      %v1416 = vshrl.u32 %v231, 16
      %v1418 = vor.u32 %v1416, %v1414
      %1419 = vrot.lane.b32.xlu0 %v1054, 4
      %v1420 = vpop.permute.xlu0 %1419
      %1421 = vrot.lane.b32.xlu0 %v1415, 4
      %v1422 = vpop.permute.xlu0 %1421
      %1423 = vrot.lane.b32.xlu0 %v1418, 4
      %v1424 = vpop.permute.xlu0 %1423
      %v1442 = vrot.slane %v1394, 1
      %v1443 = vrot.slane %v1395, 1
      %v1444 = vsel %vm1222, %v1442, %v1443
      %v1445 = vrot.slane %v1396, 1
      %v1446 = vsel %vm1222, %v1443, %v1445
      %v1447 = vrot.slane %v1397, 1
      %v1448 = vsel %vm1222, %v1445, %v1447
      %v1449 = vrot.slane %v1398, 1
      %v1450 = vsel %vm1222, %v1447, %v1449
      %v1451 = vrot.slane %v1399, 1
      %v1452 = vsel %vm1222, %v1449, %v1451
      %v1453 = vrot.slane %v1400, 1
      %v1454 = vsel %vm1222, %v1451, %v1453
      %v1455 = vrot.slane %v1401, 1
      %v1456 = vsel %vm1222, %v1453, %v1455
      %v1457 = vrot.slane %v1402, 1
      %v1458 = vsel %vm1222, %v1455, %v1457
      %v1459 = vrot.slane %v1403, 1
      %v1460 = vsel %vm1222, %v1457, %v1459
      %v1461 = vrot.slane %v1404, 1
      %v1462 = vsel %vm1222, %v1459, %v1461
      %v1463 = vrot.slane %v1405, 1
      %v1464 = vsel %vm1222, %v1461, %v1463
      %v1465 = vrot.slane %v1406, 1
      %v1466 = vsel %vm1222, %v1463, %v1465
      %v1467 = vrot.slane %v1407, 1
      %v1468 = vsel %vm1222, %v1465, %v1467
      %v1469 = vrot.slane %v1408, 1
      %v1470 = vsel %vm1222, %v1467, %v1469
      %v1471 = vrot.slane %v1409, 1
      %v1472 = vsel %vm1222, %v1469, %v1471
      %v1473 = vrot.slane %v1410, 1
      %v1474 = vsel %vm1222, %v1471, %v1473
      %1475 = vrot.lane.b32.xlu0 %v1442, 8
      %v1476 = vpop.permute.xlu0 %1475
      %1477 = vrot.lane.b32.xlu0 %v1444, 8
      %v1478 = vpop.permute.xlu0 %1477
      %1479 = vrot.lane.b32.xlu0 %v1446, 8
      %v1480 = vpop.permute.xlu0 %1479
      %1481 = vrot.lane.b32.xlu0 %v1448, 8
      %v1482 = vpop.permute.xlu0 %1481
      %1483 = vrot.lane.b32.xlu0 %v1450, 8
      %v1484 = vpop.permute.xlu0 %1483
      %1485 = vrot.lane.b32.xlu0 %v1452, 8
      %v1486 = vpop.permute.xlu0 %1485
      %1487 = vrot.lane.b32.xlu0 %v1454, 8
      %v1488 = vpop.permute.xlu0 %1487
      %1489 = vrot.lane.b32.xlu0 %v1456, 8
      %v1490 = vpop.permute.xlu0 %1489
      %1491 = vrot.lane.b32.xlu0 %v1458, 8
      %v1492 = vpop.permute.xlu0 %1491
      %1493 = vrot.lane.b32.xlu0 %v1460, 8
      %v1494 = vpop.permute.xlu0 %1493
      %1495 = vrot.lane.b32.xlu0 %v1462, 8
      %v1496 = vpop.permute.xlu0 %1495
      %1497 = vrot.lane.b32.xlu0 %v1464, 8
      %v1498 = vpop.permute.xlu0 %1497
      %1499 = vrot.lane.b32.xlu0 %v1466, 8
      %v1500 = vpop.permute.xlu0 %1499
      %1501 = vrot.lane.b32.xlu0 %v1468, 8
      %v1502 = vpop.permute.xlu0 %1501
      %1503 = vrot.lane.b32.xlu0 %v1470, 8
      %v1504 = vpop.permute.xlu0 %1503
      %1505 = vrot.lane.b32.xlu0 %v1472, 8
      %v1506 = vpop.permute.xlu0 %1505
      %1507 = vrot.lane.b32.xlu0 %v1474, 8
      %v1508 = vpop.permute.xlu0 %1507
      %v1511 = vsel %vm1290, %v1377, %v1420
      %v1513 = vsel %vm1290, %v1378, %v1176
      %v1515 = vsel %vm1290, %v1379, %v1178
      %v1517 = vsel %vm1290, %v1380, %v1180
      %v1519 = vsel %vm1290, %v1381, %v1182
      %v1521 = vsel %vm1290, %v1382, %v1184
      %v1523 = vsel %vm1290, %v1383, %v1186
      %v1525 = vsel %vm1290, %v1384, %v1188
      %v1527 = vsel %vm1290, %v1385, %v1190
      %v1529 = vsel %vm1290, %v1386, %v1192
      %v1531 = vsel %vm1290, %v1387, %v1194
      %v1533 = vsel %vm1290, %v1388, %v1196
      %v1535 = vsel %vm1290, %v1389, %v1198
      %v1537 = vsel %vm1290, %v1390, %v1200
      %v1539 = vsel %vm1290, %v1391, %v1202
      %v1542 = vsel %vm1290, %v1392, %v1422
      %v1545 = vsel %vm1290, %v1393, %v1424
      %v1547 = vsel %vm1342, %v1511, %v1476
      %v1549 = vsel %vm1342, %v1513, %v1478
      %v1551 = vsel %vm1342, %v1515, %v1480
      %v1553 = vsel %vm1342, %v1517, %v1482
      %v1555 = vsel %vm1342, %v1519, %v1484
      %v1557 = vsel %vm1342, %v1521, %v1486
      %v1559 = vsel %vm1342, %v1523, %v1488
      %v1561 = vsel %vm1342, %v1525, %v1490
      %v1563 = vsel %vm1342, %v1527, %v1492
      %v1565 = vsel %vm1342, %v1529, %v1494
      %v1567 = vsel %vm1342, %v1531, %v1496
      %v1569 = vsel %vm1342, %v1533, %v1498
      %v1571 = vsel %vm1342, %v1535, %v1500
      %v1573 = vsel %vm1342, %v1537, %v1502
      %v1575 = vsel %vm1342, %v1539, %v1504
      %v1577 = vsel %vm1342, %v1542, %v1506
      %v1579 = vsel %vm1342, %v1545, %v1508
      %v1580 = vshrl.u32 %v1547, 16
      %v1582 = vrot.slane %v1580, 7
      %v1583 = vshrl.u32 %v1549, 16
      %v1585 = vrot.slane %v1583, 7
      %v1586 = vshll.u32 %v1549, 16
      %v1588 = vor.u32 %v1585, %v1586
      %v1589 = vsel %vm882, %v1582, %v1588
      %v1590 = vshrl.u32 %v1551, 16
      %v1592 = vrot.slane %v1590, 7
      %v1593 = vshll.u32 %v1551, 16
      %v1595 = vor.u32 %v1592, %v1593
      %v1596 = vsel %vm882, %v1585, %v1595
      %v1597 = vshrl.u32 %v1553, 16
      %v1599 = vrot.slane %v1597, 7
      %v1600 = vshll.u32 %v1553, 16
      %v1602 = vor.u32 %v1599, %v1600
      %v1603 = vsel %vm882, %v1592, %v1602
      %v1604 = vshrl.u32 %v1555, 16
      %v1606 = vrot.slane %v1604, 7
      %v1607 = vshll.u32 %v1555, 16
      %v1609 = vor.u32 %v1606, %v1607
      %v1610 = vsel %vm882, %v1599, %v1609
      %v1611 = vshrl.u32 %v1557, 16
      %v1613 = vrot.slane %v1611, 7
      %v1614 = vshll.u32 %v1557, 16
      %v1616 = vor.u32 %v1613, %v1614
      %v1617 = vsel %vm882, %v1606, %v1616
      %v1618 = vshrl.u32 %v1559, 16
      %v1620 = vrot.slane %v1618, 7
      %v1621 = vshll.u32 %v1559, 16
      %v1623 = vor.u32 %v1620, %v1621
      %v1624 = vsel %vm882, %v1613, %v1623
      %v1625 = vshrl.u32 %v1561, 16
      %v1627 = vrot.slane %v1625, 7
      %v1628 = vshll.u32 %v1561, 16
      %v1630 = vor.u32 %v1627, %v1628
      %v1631 = vsel %vm882, %v1620, %v1630
      %v1632 = vshrl.u32 %v1563, 16
      %v1634 = vrot.slane %v1632, 7
      %v1635 = vshll.u32 %v1563, 16
      %v1637 = vor.u32 %v1634, %v1635
      %v1638 = vsel %vm882, %v1627, %v1637
      %v1639 = vshrl.u32 %v1565, 16
      %v1641 = vrot.slane %v1639, 7
      %v1642 = vshll.u32 %v1565, 16
      %v1644 = vor.u32 %v1641, %v1642
      %v1645 = vsel %vm882, %v1634, %v1644
      %v1646 = vshrl.u32 %v1567, 16
      %v1648 = vrot.slane %v1646, 7
      %v1649 = vshll.u32 %v1567, 16
      %v1651 = vor.u32 %v1648, %v1649
      %v1652 = vsel %vm882, %v1641, %v1651
      %v1653 = vshrl.u32 %v1569, 16
      %v1655 = vrot.slane %v1653, 7
      %v1656 = vshll.u32 %v1569, 16
      %v1658 = vor.u32 %v1655, %v1656
      %v1659 = vsel %vm882, %v1648, %v1658
      %v1660 = vshrl.u32 %v1571, 16
      %v1662 = vrot.slane %v1660, 7
      %v1663 = vshll.u32 %v1571, 16
      %v1665 = vor.u32 %v1662, %v1663
      %v1666 = vsel %vm882, %v1655, %v1665
      %v1667 = vshrl.u32 %v1573, 16
      %v1669 = vrot.slane %v1667, 7
      %v1670 = vshll.u32 %v1573, 16
      %v1672 = vor.u32 %v1669, %v1670
      %v1673 = vsel %vm882, %v1662, %v1672
      %v1674 = vshrl.u32 %v1575, 16
      %v1676 = vrot.slane %v1674, 7
      %v1677 = vshll.u32 %v1575, 16
      %v1679 = vor.u32 %v1676, %v1677
      %v1680 = vsel %vm882, %v1669, %v1679
      %v1681 = vshrl.u32 %v1577, 16
      %v1683 = vrot.slane %v1681, 7
      %v1684 = vshll.u32 %v1577, 16
      %v1686 = vor.u32 %v1683, %v1684
      %v1687 = vsel %vm882, %v1676, %v1686
      %v1688 = vshrl.u32 %v1579, 16
      %v1690 = vrot.slane %v1688, 7
      %v1691 = vshll.u32 %v1579, 16
      %v1693 = vor.u32 %v1690, %v1691
      %v1694 = vsel %vm882, %v1683, %v1693
      %v1697 = vunpack.c.l.b16 %v492
      %v1698 = vunpack.c.l.b16 %v493
      %v1699 = vpack.c.b16 %v1698, %v1697
      %v1700 = vrot.slane %v1699, 2
      %vm1701 = vcmask 97280
      %v1703 = vsel %vm1701, %v1589, 0
      %v1706 = vsel %vm1701, %v1596, 0
      %v1709 = vsel %vm1701, %v1603, 0
      %v1712 = vsel %vm1701, %v1610, 0
      %v1715 = vsel %vm1701, %v1617, 0
      %v1718 = vsel %vm1701, %v1624, 0
      %v1721 = vsel %vm1701, %v1631, 0
      %v1724 = vsel %vm1701, %v1638, 0
      %v1727 = vsel %vm1701, %v1645, 0
      %v1730 = vsel %vm1701, %v1652, 0
      %v1733 = vsel %vm1701, %v1659, 0
      %v1736 = vsel %vm1701, %v1666, 0
      %v1739 = vsel %vm1701, %v1673, 0
      %v1742 = vsel %vm1701, %v1680, 0
      %v1745 = vsel %vm1701, %v1687, 0
      %v1748 = vsel %vm1701, %v1694, 0
      %vm1750 = vcmask 1045504
      %v1752 = vsel %vm1750, %v1700, 0
      %1754 = vmatprep.subr.bf16.mxu0 0
      %1755 = vmatpush1.bf16.msra.mxu0 %v1752
      %1756 = vmatprep.subr.bf16.mxu0 0
      %1757 = vmatpush1.bf16.msra.mxu0 0
      %1758 = vmatprep.subr.bf16.mxu0 0
      %1759 = vmatpush1.bf16.msra.mxu0 0
      %1760 = vmatprep.subr.bf16.mxu0 0
      %1761 = vmatpush1.bf16.msra.mxu0 0
      %1762 = vmatprep.subr.bf16.mxu0 0
      %1763 = vmatpush1.bf16.msra.mxu0 0
      %1764 = vmatprep.subr.bf16.mxu0 0
      %1765 = vmatpush1.bf16.msra.mxu0 0
      %1766 = vmatprep.subr.bf16.mxu0 0
      %1767 = vmatpush1.bf16.msra.mxu0 0
      %1768 = vmatprep.subr.bf16.mxu0 0
      %1769 = vmatpush1.bf16.msra.mxu0 0
      %1770 = vmatprep.subr.bf16.mxu0 0
      %1771 = vmatpush1.bf16.msra.mxu0 0
      %1772 = vmatprep.subr.bf16.mxu0 0
      %1773 = vmatpush1.bf16.msra.mxu0 0
      %1774 = vmatprep.subr.bf16.mxu0 0
      %1775 = vmatpush1.bf16.msra.mxu0 0
      %1776 = vmatprep.subr.bf16.mxu0 0
      %1777 = vmatpush1.bf16.msra.mxu0 0
      %1778 = vmatprep.subr.bf16.mxu0 0
      %1779 = vmatpush1.bf16.msra.mxu0 0
      %1780 = vmatprep.subr.bf16.mxu0 0
      %1781 = vmatpush1.bf16.msra.mxu0 0
      %1782 = vmatprep.subr.bf16.mxu0 0
      %1783 = vmatpush1.bf16.msra.mxu0 0
      %1784 = vmatprep.subr.bf16.mxu0 0
      %1785 = vmatpush1.bf16.msra.mxu0 0
      %1786 = vmatprep.mubr.bf16.mxu0 0
      %1787 = vmatmul.mubr.bf16.gmra.mrb[0].mxu0 %v1703
      %v1788 = vpop.f32.mrb[0].mxu0
      %v1789 = vadd.f32 0.0, %v1788
      %v1790 = vpop.f32.mrb[0].mxu0
      %v1791 = vpop.f32.mrb[0].mxu0
      %v1792 = vadd.f32 0.0, %v1791
      %v1793 = vpop.f32.mrb[0].mxu0
      %1794 = vmatprep.mubr.bf16.mxu0 0
      %1795 = vmatmul.mubr.bf16.gmra.mrb[0].mxu0 %v1706
      %v1796 = vpop.f32.mrb[0].mxu0
      %v1797 = vadd.f32 0.0, %v1796
      %v1798 = vpop.f32.mrb[0].mxu0
      %v1799 = vpop.f32.mrb[0].mxu0
      %v1800 = vadd.f32 0.0, %v1799
      %v1801 = vpop.f32.mrb[0].mxu0
      %1802 = vmatprep.mubr.bf16.mxu0 0
      %1803 = vmatmul.mubr.bf16.gmra.mrb[0].mxu0 %v1709
      %v1804 = vpop.f32.mrb[0].mxu0
      %v1805 = vadd.f32 0.0, %v1804
      %v1806 = vpop.f32.mrb[0].mxu0
      %v1807 = vpop.f32.mrb[0].mxu0
      %v1808 = vadd.f32 0.0, %v1807
      %v1809 = vpop.f32.mrb[0].mxu0
      %1810 = vmatprep.mubr.bf16.mxu0 0
      %1811 = vmatmul.mubr.bf16.gmra.mrb[0].mxu0 %v1712
      %v1812 = vpop.f32.mrb[0].mxu0
      %v1813 = vadd.f32 0.0, %v1812
      %v1814 = vpop.f32.mrb[0].mxu0
      %v1815 = vpop.f32.mrb[0].mxu0
      %v1816 = vadd.f32 0.0, %v1815
      %v1817 = vpop.f32.mrb[0].mxu0
      %1818 = vmatprep.mubr.bf16.mxu0 0
      %1819 = vmatmul.mubr.bf16.gmra.mrb[0].mxu0 %v1715
      %v1820 = vpop.f32.mrb[0].mxu0
      %v1821 = vadd.f32 0.0, %v1820
      %v1822 = vpop.f32.mrb[0].mxu0
      %v1823 = vpop.f32.mrb[0].mxu0
      %v1824 = vadd.f32 0.0, %v1823
      %v1825 = vpop.f32.mrb[0].mxu0
      %1826 = vmatprep.mubr.bf16.mxu0 0
      %1827 = vmatmul.mubr.bf16.gmra.mrb[0].mxu0 %v1718
      %v1828 = vpop.f32.mrb[0].mxu0
      %v1829 = vadd.f32 0.0, %v1828
      %v1830 = vpop.f32.mrb[0].mxu0
      %v1831 = vpop.f32.mrb[0].mxu0
      %v1832 = vadd.f32 0.0, %v1831
      %v1833 = vpop.f32.mrb[0].mxu0
      %1834 = vmatprep.mubr.bf16.mxu0 0
      %1835 = vmatmul.mubr.bf16.gmra.mrb[0].mxu0 %v1721
      %v1836 = vpop.f32.mrb[0].mxu0
      %v1837 = vadd.f32 0.0, %v1836
      %v1838 = vpop.f32.mrb[0].mxu0
      %v1839 = vpop.f32.mrb[0].mxu0
      %v1840 = vadd.f32 0.0, %v1839
      %v1841 = vpop.f32.mrb[0].mxu0
      %1842 = vmatprep.mubr.bf16.mxu0 0
      %1843 = vmatmul.mubr.bf16.gmra.mrb[0].mxu0 %v1724
      %v1844 = vpop.f32.mrb[0].mxu0
      %v1845 = vadd.f32 0.0, %v1844
      %v1846 = vpop.f32.mrb[0].mxu0
      %v1847 = vpop.f32.mrb[0].mxu0
      %v1848 = vadd.f32 0.0, %v1847
      %v1849 = vpop.f32.mrb[0].mxu0
      %1850 = vmatprep.mubr.bf16.mxu0 0
      %1851 = vmatmul.mubr.bf16.gmra.mrb[0].mxu0 %v1727
      %v1852 = vpop.f32.mrb[0].mxu0
      %v1853 = vadd.f32 0.0, %v1852
      %v1854 = vpop.f32.mrb[0].mxu0
      %v1855 = vpop.f32.mrb[0].mxu0
      %v1856 = vadd.f32 0.0, %v1855
      %v1857 = vpop.f32.mrb[0].mxu0
      %1858 = vmatprep.mubr.bf16.mxu0 0
      %1859 = vmatmul.mubr.bf16.gmra.mrb[0].mxu0 %v1730
      %v1860 = vpop.f32.mrb[0].mxu0
      %v1861 = vadd.f32 0.0, %v1860
      %v1862 = vpop.f32.mrb[0].mxu0
      %v1863 = vpop.f32.mrb[0].mxu0
      %v1864 = vadd.f32 0.0, %v1863
      %v1865 = vpop.f32.mrb[0].mxu0
      %1866 = vmatprep.mubr.bf16.mxu0 0
      %1867 = vmatmul.mubr.bf16.gmra.mrb[0].mxu0 %v1733
      %v1868 = vpop.f32.mrb[0].mxu0
      %v1869 = vadd.f32 0.0, %v1868
      %v1870 = vpop.f32.mrb[0].mxu0
      %v1871 = vpop.f32.mrb[0].mxu0
      %v1872 = vadd.f32 0.0, %v1871
      %v1873 = vpop.f32.mrb[0].mxu0
      %1874 = vmatprep.mubr.bf16.mxu0 0
      %1875 = vmatmul.mubr.bf16.gmra.mrb[0].mxu0 %v1736
      %v1876 = vpop.f32.mrb[0].mxu0
      %v1877 = vadd.f32 0.0, %v1876
      %v1878 = vpop.f32.mrb[0].mxu0
      %v1879 = vpop.f32.mrb[0].mxu0
      %v1880 = vadd.f32 0.0, %v1879
      %v1881 = vpop.f32.mrb[0].mxu0
      %1882 = vmatprep.mubr.bf16.mxu0 0
      %1883 = vmatmul.mubr.bf16.gmra.mrb[0].mxu0 %v1739
      %v1884 = vpop.f32.mrb[0].mxu0
      %v1885 = vadd.f32 0.0, %v1884
      %v1886 = vpop.f32.mrb[0].mxu0
      %v1887 = vpop.f32.mrb[0].mxu0
      %v1888 = vadd.f32 0.0, %v1887
      %v1889 = vpop.f32.mrb[0].mxu0
      %1890 = vmatprep.mubr.bf16.mxu0 0
      %1891 = vmatmul.mubr.bf16.gmra.mrb[0].mxu0 %v1742
      %v1892 = vpop.f32.mrb[0].mxu0
      %v1893 = vadd.f32 0.0, %v1892
      %v1894 = vpop.f32.mrb[0].mxu0
      %v1895 = vpop.f32.mrb[0].mxu0
      %v1896 = vadd.f32 0.0, %v1895
      %v1897 = vpop.f32.mrb[0].mxu0
      %1898 = vmatprep.mubr.bf16.mxu0 0
      %1899 = vmatmul.mubr.bf16.gmra.mrb[0].mxu0 %v1745
      %v1900 = vpop.f32.mrb[0].mxu0
      %v1901 = vadd.f32 0.0, %v1900
      %v1902 = vpop.f32.mrb[0].mxu0
      %v1903 = vpop.f32.mrb[0].mxu0
      %v1904 = vadd.f32 0.0, %v1903
      %v1905 = vpop.f32.mrb[0].mxu0
      %1906 = vmatprep.mubr.bf16.mxu0 0
      %1907 = vmatmul.mubr.bf16.gmra.mrb[0].mxu0 %v1748
      %v1908 = vpop.f32.mrb[0].mxu0
      %v1909 = vadd.f32 0.0, %v1908
      %v1910 = vpop.f32.mrb[0].mxu0
      %v1911 = vpop.f32.mrb[0].mxu0
      %v1912 = vadd.f32 0.0, %v1911
      %v1913 = vpop.f32.mrb[0].mxu0
      %1914 = vdwg.mxu0
      %v1915 = vshrl.u32 %v1344, 16
      %v1917 = vrot.slane %v1915, 7
      %v1918 = vshrl.u32 %v1346, 16
      %v1920 = vrot.slane %v1918, 7
      %v1921 = vshll.u32 %v1346, 16
      %v1923 = vor.u32 %v1920, %v1921
      %v1924 = vsel %vm882, %v1917, %v1923
      %v1925 = vshrl.u32 %v1348, 16
      %v1927 = vrot.slane %v1925, 7
      %v1928 = vshll.u32 %v1348, 16
      %v1930 = vor.u32 %v1927, %v1928
      %v1931 = vsel %vm882, %v1920, %v1930
      %v1932 = vshrl.u32 %v1350, 16
      %v1934 = vrot.slane %v1932, 7
      %v1935 = vshll.u32 %v1350, 16
      %v1937 = vor.u32 %v1934, %v1935
      %v1938 = vsel %vm882, %v1927, %v1937
      %v1939 = vshrl.u32 %v1352, 16
      %v1941 = vrot.slane %v1939, 7
      %v1942 = vshll.u32 %v1352, 16
      %v1944 = vor.u32 %v1941, %v1942
      %v1945 = vsel %vm882, %v1934, %v1944
      %v1946 = vshrl.u32 %v1354, 16
      %v1948 = vrot.slane %v1946, 7
      %v1949 = vshll.u32 %v1354, 16
      %v1951 = vor.u32 %v1948, %v1949
      %v1952 = vsel %vm882, %v1941, %v1951
      %v1953 = vshrl.u32 %v1356, 16
      %v1955 = vrot.slane %v1953, 7
      %v1956 = vshll.u32 %v1356, 16
      %v1958 = vor.u32 %v1955, %v1956
      %v1959 = vsel %vm882, %v1948, %v1958
      %v1960 = vshrl.u32 %v1358, 16
      %v1962 = vrot.slane %v1960, 7
      %v1963 = vshll.u32 %v1358, 16
      %v1965 = vor.u32 %v1962, %v1963
      %v1966 = vsel %vm882, %v1955, %v1965
      %v1967 = vshrl.u32 %v1360, 16
      %v1969 = vrot.slane %v1967, 7
      %v1970 = vshll.u32 %v1360, 16
      %v1972 = vor.u32 %v1969, %v1970
      %v1973 = vsel %vm882, %v1962, %v1972
      %v1974 = vshrl.u32 %v1362, 16
      %v1976 = vrot.slane %v1974, 7
      %v1977 = vshll.u32 %v1362, 16
      %v1979 = vor.u32 %v1976, %v1977
      %v1980 = vsel %vm882, %v1969, %v1979
      %v1981 = vshrl.u32 %v1364, 16
      %v1983 = vrot.slane %v1981, 7
      %v1984 = vshll.u32 %v1364, 16
      %v1986 = vor.u32 %v1983, %v1984
      %v1987 = vsel %vm882, %v1976, %v1986
      %v1988 = vshrl.u32 %v1366, 16
      %v1990 = vrot.slane %v1988, 7
      %v1991 = vshll.u32 %v1366, 16
      %v1993 = vor.u32 %v1990, %v1991
      %v1994 = vsel %vm882, %v1983, %v1993
      %v1995 = vshrl.u32 %v1368, 16
      %v1997 = vrot.slane %v1995, 7
      %v1998 = vshll.u32 %v1368, 16
      %v2000 = vor.u32 %v1997, %v1998
      %v2001 = vsel %vm882, %v1990, %v2000
      %v2002 = vshrl.u32 %v1370, 16
      %v2004 = vrot.slane %v2002, 7
      %v2005 = vshll.u32 %v1370, 16
      %v2007 = vor.u32 %v2004, %v2005
      %v2008 = vsel %vm882, %v1997, %v2007
      %v2009 = vshrl.u32 %v1372, 16
      %v2011 = vrot.slane %v2009, 7
      %v2012 = vshll.u32 %v1372, 16
      %v2014 = vor.u32 %v2011, %v2012
      %v2015 = vsel %vm882, %v2004, %v2014
      %v2016 = vshrl.u32 %v1374, 16
      %v2018 = vrot.slane %v2016, 7
      %v2019 = vshll.u32 %v1374, 16
      %v2021 = vor.u32 %v2018, %v2019
      %v2022 = vsel %vm882, %v2011, %v2021
      %v2023 = vshrl.u32 %v1376, 16
      %v2025 = vrot.slane %v2023, 7
      %v2026 = vshll.u32 %v1376, 16
      %v2028 = vor.u32 %v2025, %v2026
      %v2029 = vsel %vm882, %v2018, %v2028
      %v2031 = vunpack.c.l.b16 %v491
      %v2032 = vpack.c.b16 %v1697, %v2031
      %v2034 = vsel %vm1701, %v1924, 0
      %v2037 = vsel %vm1701, %v1931, 0
      %v2040 = vsel %vm1701, %v1938, 0
      %v2043 = vsel %vm1701, %v1945, 0
      %v2046 = vsel %vm1701, %v1952, 0
      %v2049 = vsel %vm1701, %v1959, 0
      %v2052 = vsel %vm1701, %v1966, 0
      %v2055 = vsel %vm1701, %v1973, 0
      %v2058 = vsel %vm1701, %v1980, 0
      %v2061 = vsel %vm1701, %v1987, 0
      %v2064 = vsel %vm1701, %v1994, 0
      %v2067 = vsel %vm1701, %v2001, 0
      %v2070 = vsel %vm1701, %v2008, 0
      %v2073 = vsel %vm1701, %v2015, 0
      %v2076 = vsel %vm1701, %v2022, 0
      %v2079 = vsel %vm1701, %v2029, 0
      %v2082 = vsel %vm1750, %v2032, 0
      %2084 = vmatprep.subr.bf16.mxu0 0
      %2085 = vmatpush1.bf16.msra.mxu0 %v2082
      %2086 = vmatprep.subr.bf16.mxu0 0
      %2087 = vmatpush1.bf16.msra.mxu0 0
      %2088 = vmatprep.subr.bf16.mxu0 0
      %2089 = vmatpush1.bf16.msra.mxu0 0
      %2090 = vmatprep.subr.bf16.mxu0 0
      %2091 = vmatpush1.bf16.msra.mxu0 0
      %2092 = vmatprep.subr.bf16.mxu0 0
      %2093 = vmatpush1.bf16.msra.mxu0 0
      %2094 = vmatprep.subr.bf16.mxu0 0
      %2095 = vmatpush1.bf16.msra.mxu0 0
      %2096 = vmatprep.subr.bf16.mxu0 0
      %2097 = vmatpush1.bf16.msra.mxu0 0
      %2098 = vmatprep.subr.bf16.mxu0 0
      %2099 = vmatpush1.bf16.msra.mxu0 0
      %2100 = vmatprep.subr.bf16.mxu0 0
      %2101 = vmatpush1.bf16.msra.mxu0 0
      %2102 = vmatprep.subr.bf16.mxu0 0
      %2103 = vmatpush1.bf16.msra.mxu0 0
      %2104 = vmatprep.subr.bf16.mxu0 0
      %2105 = vmatpush1.bf16.msra.mxu0 0
      %2106 = vmatprep.subr.bf16.mxu0 0
      %2107 = vmatpush1.bf16.msra.mxu0 0
      %2108 = vmatprep.subr.bf16.mxu0 0
      %2109 = vmatpush1.bf16.msra.mxu0 0
      %2110 = vmatprep.subr.bf16.mxu0 0
      %2111 = vmatpush1.bf16.msra.mxu0 0
      %2112 = vmatprep.subr.bf16.mxu0 0
      %2113 = vmatpush1.bf16.msra.mxu0 0
      %2114 = vmatprep.subr.bf16.mxu0 0
      %2115 = vmatpush1.bf16.msra.mxu0 0
      %2116 = vmatprep.mubr.bf16.mxu0 0
      %2117 = vmatmul.mubr.bf16.gmra.mrb[0].mxu0 %v2034
      %v2118 = vpop.f32.mrb[0].mxu0
      %v2119 = vadd.f32 %v1789, %v2118
      %v2120 = vpop.f32.mrb[0].mxu0
      %v2121 = vpop.f32.mrb[0].mxu0
      %v2122 = vadd.f32 %v1792, %v2121
      %v2123 = vpop.f32.mrb[0].mxu0
      %2124 = vmatprep.mubr.bf16.mxu0 0
      %2125 = vmatmul.mubr.bf16.gmra.mrb[0].mxu0 %v2037
      %v2126 = vpop.f32.mrb[0].mxu0
      %v2127 = vadd.f32 %v1797, %v2126
      %v2128 = vpop.f32.mrb[0].mxu0
      %v2129 = vpop.f32.mrb[0].mxu0
      %v2130 = vadd.f32 %v1800, %v2129
      %v2131 = vpop.f32.mrb[0].mxu0
      %2132 = vmatprep.mubr.bf16.mxu0 0
      %2133 = vmatmul.mubr.bf16.gmra.mrb[0].mxu0 %v2040
      %v2134 = vpop.f32.mrb[0].mxu0
      %v2135 = vadd.f32 %v1805, %v2134
      %v2136 = vpop.f32.mrb[0].mxu0
      %v2137 = vpop.f32.mrb[0].mxu0
      %v2138 = vadd.f32 %v1808, %v2137
      %v2139 = vpop.f32.mrb[0].mxu0
      %2140 = vmatprep.mubr.bf16.mxu0 0
      %2141 = vmatmul.mubr.bf16.gmra.mrb[0].mxu0 %v2043
      %v2142 = vpop.f32.mrb[0].mxu0
      %v2143 = vadd.f32 %v1813, %v2142
      %v2144 = vpop.f32.mrb[0].mxu0
      %v2145 = vpop.f32.mrb[0].mxu0
      %v2146 = vadd.f32 %v1816, %v2145
      %v2147 = vpop.f32.mrb[0].mxu0
      %2148 = vmatprep.mubr.bf16.mxu0 0
      %2149 = vmatmul.mubr.bf16.gmra.mrb[0].mxu0 %v2046
      %v2150 = vpop.f32.mrb[0].mxu0
      %v2151 = vadd.f32 %v1821, %v2150
      %v2152 = vpop.f32.mrb[0].mxu0
      %v2153 = vpop.f32.mrb[0].mxu0
      %v2154 = vadd.f32 %v1824, %v2153
      %v2155 = vpop.f32.mrb[0].mxu0
      %2156 = vmatprep.mubr.bf16.mxu0 0
      %2157 = vmatmul.mubr.bf16.gmra.mrb[0].mxu0 %v2049
      %v2158 = vpop.f32.mrb[0].mxu0
      %v2159 = vadd.f32 %v1829, %v2158
      %v2160 = vpop.f32.mrb[0].mxu0
      %v2161 = vpop.f32.mrb[0].mxu0
      %v2162 = vadd.f32 %v1832, %v2161
      %v2163 = vpop.f32.mrb[0].mxu0
      %2164 = vmatprep.mubr.bf16.mxu0 0
      %2165 = vmatmul.mubr.bf16.gmra.mrb[0].mxu0 %v2052
      %v2166 = vpop.f32.mrb[0].mxu0
      %v2167 = vadd.f32 %v1837, %v2166
      %v2168 = vpop.f32.mrb[0].mxu0
      %v2169 = vpop.f32.mrb[0].mxu0
      %v2170 = vadd.f32 %v1840, %v2169
      %v2171 = vpop.f32.mrb[0].mxu0
      %2172 = vmatprep.mubr.bf16.mxu0 0
      %2173 = vmatmul.mubr.bf16.gmra.mrb[0].mxu0 %v2055
      %v2174 = vpop.f32.mrb[0].mxu0
      %v2175 = vadd.f32 %v1845, %v2174
      %v2176 = vpop.f32.mrb[0].mxu0
      %v2177 = vpop.f32.mrb[0].mxu0
      %v2178 = vadd.f32 %v1848, %v2177
      %v2179 = vpop.f32.mrb[0].mxu0
      %2180 = vmatprep.mubr.bf16.mxu0 0
      %2181 = vmatmul.mubr.bf16.gmra.mrb[0].mxu0 %v2058
      %v2182 = vpop.f32.mrb[0].mxu0
      %v2183 = vadd.f32 %v1853, %v2182
      %v2184 = vpop.f32.mrb[0].mxu0
      %v2185 = vpop.f32.mrb[0].mxu0
      %v2186 = vadd.f32 %v1856, %v2185
      %v2187 = vpop.f32.mrb[0].mxu0
      %2188 = vmatprep.mubr.bf16.mxu0 0
      %2189 = vmatmul.mubr.bf16.gmra.mrb[0].mxu0 %v2061
      %v2190 = vpop.f32.mrb[0].mxu0
      %v2191 = vadd.f32 %v1861, %v2190
      %v2192 = vpop.f32.mrb[0].mxu0
      %v2193 = vpop.f32.mrb[0].mxu0
      %v2194 = vadd.f32 %v1864, %v2193
      %v2195 = vpop.f32.mrb[0].mxu0
      %2196 = vmatprep.mubr.bf16.mxu0 0
      %2197 = vmatmul.mubr.bf16.gmra.mrb[0].mxu0 %v2064
      %v2198 = vpop.f32.mrb[0].mxu0
      %v2199 = vadd.f32 %v1869, %v2198
      %v2200 = vpop.f32.mrb[0].mxu0
      %v2201 = vpop.f32.mrb[0].mxu0
      %v2202 = vadd.f32 %v1872, %v2201
      %v2203 = vpop.f32.mrb[0].mxu0
      %2204 = vmatprep.mubr.bf16.mxu0 0
      %2205 = vmatmul.mubr.bf16.gmra.mrb[0].mxu0 %v2067
      %v2206 = vpop.f32.mrb[0].mxu0
      %v2207 = vadd.f32 %v1877, %v2206
      %v2208 = vpop.f32.mrb[0].mxu0
      %v2209 = vpop.f32.mrb[0].mxu0
      %v2210 = vadd.f32 %v1880, %v2209
      %v2211 = vpop.f32.mrb[0].mxu0
      %2212 = vmatprep.mubr.bf16.mxu0 0
      %2213 = vmatmul.mubr.bf16.gmra.mrb[0].mxu0 %v2070
      %v2214 = vpop.f32.mrb[0].mxu0
      %v2215 = vadd.f32 %v1885, %v2214
      %v2216 = vpop.f32.mrb[0].mxu0
      %v2217 = vpop.f32.mrb[0].mxu0
      %v2218 = vadd.f32 %v1888, %v2217
      %v2219 = vpop.f32.mrb[0].mxu0
      %2220 = vmatprep.mubr.bf16.mxu0 0
      %2221 = vmatmul.mubr.bf16.gmra.mrb[0].mxu0 %v2073
      %v2222 = vpop.f32.mrb[0].mxu0
      %v2223 = vadd.f32 %v1893, %v2222
      %v2224 = vpop.f32.mrb[0].mxu0
      %v2225 = vpop.f32.mrb[0].mxu0
      %v2226 = vadd.f32 %v1896, %v2225
      %v2227 = vpop.f32.mrb[0].mxu0
      %2228 = vmatprep.mubr.bf16.mxu0 0
      %2229 = vmatmul.mubr.bf16.gmra.mrb[0].mxu0 %v2076
      %v2230 = vpop.f32.mrb[0].mxu0
      %v2231 = vadd.f32 %v1901, %v2230
      %v2232 = vpop.f32.mrb[0].mxu0
      %v2233 = vpop.f32.mrb[0].mxu0
      %v2234 = vadd.f32 %v1904, %v2233
      %v2235 = vpop.f32.mrb[0].mxu0
      %2236 = vmatprep.mubr.bf16.mxu0 0
      %2237 = vmatmul.mubr.bf16.gmra.mrb[0].mxu0 %v2079
      %v2238 = vpop.f32.mrb[0].mxu0
      %v2239 = vadd.f32 %v1909, %v2238
      %v2240 = vpop.f32.mrb[0].mxu0
      %v2241 = vpop.f32.mrb[0].mxu0
      %v2242 = vadd.f32 %v1912, %v2241
      %v2243 = vpop.f32.mrb[0].mxu0
      %2244 = vdwg.mxu0
      %v2245 = vsel %vm736, %v216, 0
      %v2246 = vsel %vm737, %v217, 0
      %v2247 = vsel %vm738, %v218, 0
      %v2248 = vsel %vm739, %v219, 0
      %v2249 = vsel %vm740, %v220, 0
      %v2250 = vsel %vm741, %v221, 0
      %v2251 = vsel %vm742, %v222, 0
      %v2252 = vsel %vm743, %v223, 0
      %v2253 = vsel %vm744, %v224, 0
      %v2254 = vsel %vm745, %v225, 0
      %v2255 = vsel %vm746, %v226, 0
      %v2256 = vsel %vm747, %v227, 0
      %v2257 = vsel %vm748, %v228, 0
      %v2258 = vsel %vm749, %v229, 0
      %v2259 = vsel %vm750, %v230, 0
      %v2260 = vsel %vm751, %v231, 0
      %v2261 = vsel %vm752, %v232, 0
      %v2262 = vsel %vm1010, %v217, 0
      %v2263 = vsel %vm1011, %v218, 0
      %v2264 = vsel %vm1012, %v219, 0
      %v2265 = vsel %vm1013, %v220, 0
      %v2266 = vsel %vm1014, %v221, 0
      %v2267 = vsel %vm1015, %v222, 0
      %v2268 = vsel %vm1016, %v223, 0
      %v2269 = vsel %vm1017, %v224, 0
      %v2270 = vsel %vm1018, %v225, 0
      %v2271 = vsel %vm1019, %v226, 0
      %v2272 = vsel %vm1020, %v227, 0
      %v2273 = vsel %vm1021, %v228, 0
      %v2274 = vsel %vm1022, %v229, 0
      %v2275 = vsel %vm1023, %v230, 0
      %v2276 = vsel %vm1024, %v231, 0
      %v2277 = vsel %vm1025, %v232, 0
      %v2278 = vsel %vm1026, %v233, 0
      %v2280 = vshll.u32 %v232, 16
      %v2282 = vrot.slane %v2280, 1
      %v2283 = vsel %vm608, %v1418, %v2282
      %v2284 = vshrl.u32 %v232, 16
      %v2286 = vor.u32 %v2284, %v2282
      %2287 = vrot.lane.b32.xlu0 %v1062, 4
      %v2288 = vpop.permute.xlu0 %2287
      %2289 = vrot.lane.b32.xlu0 %v2283, 4
      %v2290 = vpop.permute.xlu0 %2289
      %2291 = vrot.lane.b32.xlu0 %v2286, 4
      %v2292 = vpop.permute.xlu0 %2291
      %v2310 = vrot.slane %v2262, 1
      %v2311 = vrot.slane %v2263, 1
      %v2312 = vsel %vm1222, %v2310, %v2311
      %v2313 = vrot.slane %v2264, 1
      %v2314 = vsel %vm1222, %v2311, %v2313
      %v2315 = vrot.slane %v2265, 1
      %v2316 = vsel %vm1222, %v2313, %v2315
      %v2317 = vrot.slane %v2266, 1
      %v2318 = vsel %vm1222, %v2315, %v2317
      %v2319 = vrot.slane %v2267, 1
      %v2320 = vsel %vm1222, %v2317, %v2319
      %v2321 = vrot.slane %v2268, 1
      %v2322 = vsel %vm1222, %v2319, %v2321
      %v2323 = vrot.slane %v2269, 1
      %v2324 = vsel %vm1222, %v2321, %v2323
      %v2325 = vrot.slane %v2270, 1
      %v2326 = vsel %vm1222, %v2323, %v2325
      %v2327 = vrot.slane %v2271, 1
      %v2328 = vsel %vm1222, %v2325, %v2327
      %v2329 = vrot.slane %v2272, 1
      %v2330 = vsel %vm1222, %v2327, %v2329
      %v2331 = vrot.slane %v2273, 1
      %v2332 = vsel %vm1222, %v2329, %v2331
      %v2333 = vrot.slane %v2274, 1
      %v2334 = vsel %vm1222, %v2331, %v2333
      %v2335 = vrot.slane %v2275, 1
      %v2336 = vsel %vm1222, %v2333, %v2335
      %v2337 = vrot.slane %v2276, 1
      %v2338 = vsel %vm1222, %v2335, %v2337
      %v2339 = vrot.slane %v2277, 1
      %v2340 = vsel %vm1222, %v2337, %v2339
      %v2341 = vrot.slane %v2278, 1
      %v2342 = vsel %vm1222, %v2339, %v2341
      %2343 = vrot.lane.b32.xlu0 %v2310, 8
      %v2344 = vpop.permute.xlu0 %2343
      %2345 = vrot.lane.b32.xlu0 %v2312, 8
      %v2346 = vpop.permute.xlu0 %2345
      %2347 = vrot.lane.b32.xlu0 %v2314, 8
      %v2348 = vpop.permute.xlu0 %2347
      %2349 = vrot.lane.b32.xlu0 %v2316, 8
      %v2350 = vpop.permute.xlu0 %2349
      %2351 = vrot.lane.b32.xlu0 %v2318, 8
      %v2352 = vpop.permute.xlu0 %2351
      %2353 = vrot.lane.b32.xlu0 %v2320, 8
      %v2354 = vpop.permute.xlu0 %2353
      %2355 = vrot.lane.b32.xlu0 %v2322, 8
      %v2356 = vpop.permute.xlu0 %2355
      %2357 = vrot.lane.b32.xlu0 %v2324, 8
      %v2358 = vpop.permute.xlu0 %2357
      %2359 = vrot.lane.b32.xlu0 %v2326, 8
      %v2360 = vpop.permute.xlu0 %2359
      %2361 = vrot.lane.b32.xlu0 %v2328, 8
      %v2362 = vpop.permute.xlu0 %2361
      %2363 = vrot.lane.b32.xlu0 %v2330, 8
      %v2364 = vpop.permute.xlu0 %2363
      %2365 = vrot.lane.b32.xlu0 %v2332, 8
      %v2366 = vpop.permute.xlu0 %2365
      %2367 = vrot.lane.b32.xlu0 %v2334, 8
      %v2368 = vpop.permute.xlu0 %2367
      %2369 = vrot.lane.b32.xlu0 %v2336, 8
      %v2370 = vpop.permute.xlu0 %2369
      %2371 = vrot.lane.b32.xlu0 %v2338, 8
      %v2372 = vpop.permute.xlu0 %2371
      %2373 = vrot.lane.b32.xlu0 %v2340, 8
      %v2374 = vpop.permute.xlu0 %2373
      %2375 = vrot.lane.b32.xlu0 %v2342, 8
      %v2376 = vpop.permute.xlu0 %2375
      %v2379 = vsel %vm1290, %v2245, %v2288
      %v2381 = vsel %vm1290, %v2246, %v1178
      %v2383 = vsel %vm1290, %v2247, %v1180
      %v2385 = vsel %vm1290, %v2248, %v1182
      %v2387 = vsel %vm1290, %v2249, %v1184
      %v2389 = vsel %vm1290, %v2250, %v1186
      %v2391 = vsel %vm1290, %v2251, %v1188
      %v2393 = vsel %vm1290, %v2252, %v1190
      %v2395 = vsel %vm1290, %v2253, %v1192
      %v2397 = vsel %vm1290, %v2254, %v1194
      %v2399 = vsel %vm1290, %v2255, %v1196
      %v2401 = vsel %vm1290, %v2256, %v1198
      %v2403 = vsel %vm1290, %v2257, %v1200
      %v2405 = vsel %vm1290, %v2258, %v1202
      %v2407 = vsel %vm1290, %v2259, %v1422
      %v2410 = vsel %vm1290, %v2260, %v2290
      %v2413 = vsel %vm1290, %v2261, %v2292
      %v2415 = vsel %vm1342, %v2379, %v2344
      %v2417 = vsel %vm1342, %v2381, %v2346
      %v2419 = vsel %vm1342, %v2383, %v2348
      %v2421 = vsel %vm1342, %v2385, %v2350
      %v2423 = vsel %vm1342, %v2387, %v2352
      %v2425 = vsel %vm1342, %v2389, %v2354
      %v2427 = vsel %vm1342, %v2391, %v2356
      %v2429 = vsel %vm1342, %v2393, %v2358
      %v2431 = vsel %vm1342, %v2395, %v2360
      %v2433 = vsel %vm1342, %v2397, %v2362
      %v2435 = vsel %vm1342, %v2399, %v2364
      %v2437 = vsel %vm1342, %v2401, %v2366
      %v2439 = vsel %vm1342, %v2403, %v2368
      %v2441 = vsel %vm1342, %v2405, %v2370
      %v2443 = vsel %vm1342, %v2407, %v2372
      %v2445 = vsel %vm1342, %v2410, %v2374
      %v2447 = vsel %vm1342, %v2413, %v2376
      %v2448 = vshrl.u32 %v2415, 16
      %v2450 = vrot.slane %v2448, 7
      %v2451 = vshrl.u32 %v2417, 16
      %v2453 = vrot.slane %v2451, 7
      %v2454 = vshll.u32 %v2417, 16
      %v2456 = vor.u32 %v2453, %v2454
      %v2457 = vsel %vm882, %v2450, %v2456
      %v2458 = vshrl.u32 %v2419, 16
      %v2460 = vrot.slane %v2458, 7
      %v2461 = vshll.u32 %v2419, 16
      %v2463 = vor.u32 %v2460, %v2461
      %v2464 = vsel %vm882, %v2453, %v2463
      %v2465 = vshrl.u32 %v2421, 16
      %v2467 = vrot.slane %v2465, 7
      %v2468 = vshll.u32 %v2421, 16
      %v2470 = vor.u32 %v2467, %v2468
      %v2471 = vsel %vm882, %v2460, %v2470
      %v2472 = vshrl.u32 %v2423, 16
      %v2474 = vrot.slane %v2472, 7
      %v2475 = vshll.u32 %v2423, 16
      %v2477 = vor.u32 %v2474, %v2475
      %v2478 = vsel %vm882, %v2467, %v2477
      %v2479 = vshrl.u32 %v2425, 16
      %v2481 = vrot.slane %v2479, 7
      %v2482 = vshll.u32 %v2425, 16
      %v2484 = vor.u32 %v2481, %v2482
      %v2485 = vsel %vm882, %v2474, %v2484
      %v2486 = vshrl.u32 %v2427, 16
      %v2488 = vrot.slane %v2486, 7
      %v2489 = vshll.u32 %v2427, 16
      %v2491 = vor.u32 %v2488, %v2489
      %v2492 = vsel %vm882, %v2481, %v2491
      %v2493 = vshrl.u32 %v2429, 16
      %v2495 = vrot.slane %v2493, 7
      %v2496 = vshll.u32 %v2429, 16
      %v2498 = vor.u32 %v2495, %v2496
      %v2499 = vsel %vm882, %v2488, %v2498
      %v2500 = vshrl.u32 %v2431, 16
      %v2502 = vrot.slane %v2500, 7
      %v2503 = vshll.u32 %v2431, 16
      %v2505 = vor.u32 %v2502, %v2503
      %v2506 = vsel %vm882, %v2495, %v2505
      %v2507 = vshrl.u32 %v2433, 16
      %v2509 = vrot.slane %v2507, 7
      %v2510 = vshll.u32 %v2433, 16
      %v2512 = vor.u32 %v2509, %v2510
      %v2513 = vsel %vm882, %v2502, %v2512
      %v2514 = vshrl.u32 %v2435, 16
      %v2516 = vrot.slane %v2514, 7
      %v2517 = vshll.u32 %v2435, 16
      %v2519 = vor.u32 %v2516, %v2517
      %v2520 = vsel %vm882, %v2509, %v2519
      %v2521 = vshrl.u32 %v2437, 16
      %v2523 = vrot.slane %v2521, 7
      %v2524 = vshll.u32 %v2437, 16
      %v2526 = vor.u32 %v2523, %v2524
      %v2527 = vsel %vm882, %v2516, %v2526
      %v2528 = vshrl.u32 %v2439, 16
      %v2530 = vrot.slane %v2528, 7
      %v2531 = vshll.u32 %v2439, 16
      %v2533 = vor.u32 %v2530, %v2531
      %v2534 = vsel %vm882, %v2523, %v2533
      %v2535 = vshrl.u32 %v2441, 16
      %v2537 = vrot.slane %v2535, 7
      %v2538 = vshll.u32 %v2441, 16
      %v2540 = vor.u32 %v2537, %v2538
      %v2541 = vsel %vm882, %v2530, %v2540
      %v2542 = vshrl.u32 %v2443, 16
      %v2544 = vrot.slane %v2542, 7
      %v2545 = vshll.u32 %v2443, 16
      %v2547 = vor.u32 %v2544, %v2545
      %v2548 = vsel %vm882, %v2537, %v2547
      %v2549 = vshrl.u32 %v2445, 16
      %v2551 = vrot.slane %v2549, 7
      %v2552 = vshll.u32 %v2445, 16
      %v2554 = vor.u32 %v2551, %v2552
      %v2555 = vsel %vm882, %v2544, %v2554
      %v2556 = vshrl.u32 %v2447, 16
      %v2558 = vrot.slane %v2556, 7
      %v2559 = vshll.u32 %v2447, 16
      %v2561 = vor.u32 %v2558, %v2559
      %v2562 = vsel %vm882, %v2551, %v2561
      %v2565 = vunpack.c.l.b16 %v494
      %v2566 = vunpack.c.l.b16 %v495
      %v2567 = vpack.c.b16 %v2566, %v2565
      %v2569 = vsel %vm1701, %v2457, 0
      %v2572 = vsel %vm1701, %v2464, 0
      %v2575 = vsel %vm1701, %v2471, 0
      %v2578 = vsel %vm1701, %v2478, 0
      %v2581 = vsel %vm1701, %v2485, 0
      %v2584 = vsel %vm1701, %v2492, 0
      %v2587 = vsel %vm1701, %v2499, 0
      %v2590 = vsel %vm1701, %v2506, 0
      %v2593 = vsel %vm1701, %v2513, 0
      %v2596 = vsel %vm1701, %v2520, 0
      %v2599 = vsel %vm1701, %v2527, 0
      %v2602 = vsel %vm1701, %v2534, 0
      %v2605 = vsel %vm1701, %v2541, 0
      %v2608 = vsel %vm1701, %v2548, 0
      %v2611 = vsel %vm1701, %v2555, 0
      %v2614 = vsel %vm1701, %v2562, 0
      %v2617 = vsel %vm1750, %v2567, 0
      %2619 = vmatprep.subr.bf16.mxu0 0
      %2620 = vmatpush1.bf16.msra.mxu0 %v2617
      %2621 = vmatprep.subr.bf16.mxu0 0
      %2622 = vmatpush1.bf16.msra.mxu0 0
      %2623 = vmatprep.subr.bf16.mxu0 0
      %2624 = vmatpush1.bf16.msra.mxu0 0
      %2625 = vmatprep.subr.bf16.mxu0 0
      %2626 = vmatpush1.bf16.msra.mxu0 0
      %2627 = vmatprep.subr.bf16.mxu0 0
      %2628 = vmatpush1.bf16.msra.mxu0 0
      %2629 = vmatprep.subr.bf16.mxu0 0
      %2630 = vmatpush1.bf16.msra.mxu0 0
      %2631 = vmatprep.subr.bf16.mxu0 0
      %2632 = vmatpush1.bf16.msra.mxu0 0
      %2633 = vmatprep.subr.bf16.mxu0 0
      %2634 = vmatpush1.bf16.msra.mxu0 0
      %2635 = vmatprep.subr.bf16.mxu0 0
      %2636 = vmatpush1.bf16.msra.mxu0 0
      %2637 = vmatprep.subr.bf16.mxu0 0
      %2638 = vmatpush1.bf16.msra.mxu0 0
      %2639 = vmatprep.subr.bf16.mxu0 0
      %2640 = vmatpush1.bf16.msra.mxu0 0
      %2641 = vmatprep.subr.bf16.mxu0 0
      %2642 = vmatpush1.bf16.msra.mxu0 0
      %2643 = vmatprep.subr.bf16.mxu0 0
      %2644 = vmatpush1.bf16.msra.mxu0 0
      %2645 = vmatprep.subr.bf16.mxu0 0
      %2646 = vmatpush1.bf16.msra.mxu0 0
      %2647 = vmatprep.subr.bf16.mxu0 0
      %2648 = vmatpush1.bf16.msra.mxu0 0
      %2649 = vmatprep.subr.bf16.mxu0 0
      %2650 = vmatpush1.bf16.msra.mxu0 0
      %2651 = vmatprep.mubr.bf16.mxu0 0
      %2652 = vmatmul.mubr.bf16.gmra.mrb[0].mxu0 %v2569
      %v2653 = vpop.f32.mrb[0].mxu0
      %v2654 = vadd.f32 0.0, %v2653
      %v2655 = vpop.f32.mrb[0].mxu0
      %v2656 = vpop.f32.mrb[0].mxu0
      %v2657 = vadd.f32 0.0, %v2656
      %v2658 = vpop.f32.mrb[0].mxu0
      %2659 = vmatprep.mubr.bf16.mxu0 0
      %2660 = vmatmul.mubr.bf16.gmra.mrb[0].mxu0 %v2572
      %v2661 = vpop.f32.mrb[0].mxu0
      %v2662 = vadd.f32 0.0, %v2661
      %v2663 = vpop.f32.mrb[0].mxu0
      %v2664 = vpop.f32.mrb[0].mxu0
      %v2665 = vadd.f32 0.0, %v2664
      %v2666 = vpop.f32.mrb[0].mxu0
      %2667 = vmatprep.mubr.bf16.mxu0 0
      %2668 = vmatmul.mubr.bf16.gmra.mrb[0].mxu0 %v2575
      %v2669 = vpop.f32.mrb[0].mxu0
      %v2670 = vadd.f32 0.0, %v2669
      %v2671 = vpop.f32.mrb[0].mxu0
      %v2672 = vpop.f32.mrb[0].mxu0
      %v2673 = vadd.f32 0.0, %v2672
      %v2674 = vpop.f32.mrb[0].mxu0
      %2675 = vmatprep.mubr.bf16.mxu0 0
      %2676 = vmatmul.mubr.bf16.gmra.mrb[0].mxu0 %v2578
      %v2677 = vpop.f32.mrb[0].mxu0
      %v2678 = vadd.f32 0.0, %v2677
      %v2679 = vpop.f32.mrb[0].mxu0
      %v2680 = vpop.f32.mrb[0].mxu0
      %v2681 = vadd.f32 0.0, %v2680
      %v2682 = vpop.f32.mrb[0].mxu0
      %2683 = vmatprep.mubr.bf16.mxu0 0
      %2684 = vmatmul.mubr.bf16.gmra.mrb[0].mxu0 %v2581
      %v2685 = vpop.f32.mrb[0].mxu0
      %v2686 = vadd.f32 0.0, %v2685
      %v2687 = vpop.f32.mrb[0].mxu0
      %v2688 = vpop.f32.mrb[0].mxu0
      %v2689 = vadd.f32 0.0, %v2688
      %v2690 = vpop.f32.mrb[0].mxu0
      %2691 = vmatprep.mubr.bf16.mxu0 0
      %2692 = vmatmul.mubr.bf16.gmra.mrb[0].mxu0 %v2584
      %v2693 = vpop.f32.mrb[0].mxu0
      %v2694 = vadd.f32 0.0, %v2693
      %v2695 = vpop.f32.mrb[0].mxu0
      %v2696 = vpop.f32.mrb[0].mxu0
      %v2697 = vadd.f32 0.0, %v2696
      %v2698 = vpop.f32.mrb[0].mxu0
      %2699 = vmatprep.mubr.bf16.mxu0 0
      %2700 = vmatmul.mubr.bf16.gmra.mrb[0].mxu0 %v2587
      %v2701 = vpop.f32.mrb[0].mxu0
      %v2702 = vadd.f32 0.0, %v2701
      %v2703 = vpop.f32.mrb[0].mxu0
      %v2704 = vpop.f32.mrb[0].mxu0
      %v2705 = vadd.f32 0.0, %v2704
      %v2706 = vpop.f32.mrb[0].mxu0
      %2707 = vmatprep.mubr.bf16.mxu0 0
      %2708 = vmatmul.mubr.bf16.gmra.mrb[0].mxu0 %v2590
      %v2709 = vpop.f32.mrb[0].mxu0
      %v2710 = vadd.f32 0.0, %v2709
      %v2711 = vpop.f32.mrb[0].mxu0
      %v2712 = vpop.f32.mrb[0].mxu0
      %v2713 = vadd.f32 0.0, %v2712
      %v2714 = vpop.f32.mrb[0].mxu0
      %2715 = vmatprep.mubr.bf16.mxu0 0
      %2716 = vmatmul.mubr.bf16.gmra.mrb[0].mxu0 %v2593
      %v2717 = vpop.f32.mrb[0].mxu0
      %v2718 = vadd.f32 0.0, %v2717
      %v2719 = vpop.f32.mrb[0].mxu0
      %v2720 = vpop.f32.mrb[0].mxu0
      %v2721 = vadd.f32 0.0, %v2720
      %v2722 = vpop.f32.mrb[0].mxu0
      %2723 = vmatprep.mubr.bf16.mxu0 0
      %2724 = vmatmul.mubr.bf16.gmra.mrb[0].mxu0 %v2596
      %v2725 = vpop.f32.mrb[0].mxu0
      %v2726 = vadd.f32 0.0, %v2725
      %v2727 = vpop.f32.mrb[0].mxu0
      %v2728 = vpop.f32.mrb[0].mxu0
      %v2729 = vadd.f32 0.0, %v2728
      %v2730 = vpop.f32.mrb[0].mxu0
      %2731 = vmatprep.mubr.bf16.mxu0 0
      %2732 = vmatmul.mubr.bf16.gmra.mrb[0].mxu0 %v2599
      %v2733 = vpop.f32.mrb[0].mxu0
      %v2734 = vadd.f32 0.0, %v2733
      %v2735 = vpop.f32.mrb[0].mxu0
      %v2736 = vpop.f32.mrb[0].mxu0
      %v2737 = vadd.f32 0.0, %v2736
      %v2738 = vpop.f32.mrb[0].mxu0
      %2739 = vmatprep.mubr.bf16.mxu0 0
      %2740 = vmatmul.mubr.bf16.gmra.mrb[0].mxu0 %v2602
      %v2741 = vpop.f32.mrb[0].mxu0
      %v2742 = vadd.f32 0.0, %v2741
      %v2743 = vpop.f32.mrb[0].mxu0
      %v2744 = vpop.f32.mrb[0].mxu0
      %v2745 = vadd.f32 0.0, %v2744
      %v2746 = vpop.f32.mrb[0].mxu0
      %2747 = vmatprep.mubr.bf16.mxu0 0
      %2748 = vmatmul.mubr.bf16.gmra.mrb[0].mxu0 %v2605
      %v2749 = vpop.f32.mrb[0].mxu0
      %v2750 = vadd.f32 0.0, %v2749
      %v2751 = vpop.f32.mrb[0].mxu0
      %v2752 = vpop.f32.mrb[0].mxu0
      %v2753 = vadd.f32 0.0, %v2752
      %v2754 = vpop.f32.mrb[0].mxu0
      %2755 = vmatprep.mubr.bf16.mxu0 0
      %2756 = vmatmul.mubr.bf16.gmra.mrb[0].mxu0 %v2608
      %v2757 = vpop.f32.mrb[0].mxu0
      %v2758 = vadd.f32 0.0, %v2757
      %v2759 = vpop.f32.mrb[0].mxu0
      %v2760 = vpop.f32.mrb[0].mxu0
      %v2761 = vadd.f32 0.0, %v2760
      %v2762 = vpop.f32.mrb[0].mxu0
      %2763 = vmatprep.mubr.bf16.mxu0 0
      %2764 = vmatmul.mubr.bf16.gmra.mrb[0].mxu0 %v2611
      %v2765 = vpop.f32.mrb[0].mxu0
      %v2766 = vadd.f32 0.0, %v2765
      %v2767 = vpop.f32.mrb[0].mxu0
      %v2768 = vpop.f32.mrb[0].mxu0
      %v2769 = vadd.f32 0.0, %v2768
      %v2770 = vpop.f32.mrb[0].mxu0
      %2771 = vmatprep.mubr.bf16.mxu0 0
      %2772 = vmatmul.mubr.bf16.gmra.mrb[0].mxu0 %v2614
      %v2773 = vpop.f32.mrb[0].mxu0
      %v2774 = vadd.f32 0.0, %v2773
      %v2775 = vpop.f32.mrb[0].mxu0
      %v2776 = vpop.f32.mrb[0].mxu0
      %v2777 = vadd.f32 0.0, %v2776
      %v2778 = vpop.f32.mrb[0].mxu0
      %2779 = vdwg.mxu0
      %v2780 = vadd.f32 %v2119, %v2654
      %v2781 = vadd.f32 %v2122, %v2657
      %v2782 = vadd.f32 %v2127, %v2662
      %v2783 = vadd.f32 %v2130, %v2665
      %v2784 = vadd.f32 %v2135, %v2670
      %v2785 = vadd.f32 %v2138, %v2673
      %v2786 = vadd.f32 %v2143, %v2678
      %v2787 = vadd.f32 %v2146, %v2681
      %v2788 = vadd.f32 %v2151, %v2686
      %v2789 = vadd.f32 %v2154, %v2689
      %v2790 = vadd.f32 %v2159, %v2694
      %v2791 = vadd.f32 %v2162, %v2697
      %v2792 = vadd.f32 %v2167, %v2702
      %v2793 = vadd.f32 %v2170, %v2705
      %v2794 = vadd.f32 %v2175, %v2710
      %v2795 = vadd.f32 %v2178, %v2713
      %v2796 = vadd.f32 %v2183, %v2718
      %v2797 = vadd.f32 %v2186, %v2721
      %v2798 = vadd.f32 %v2191, %v2726
      %v2799 = vadd.f32 %v2194, %v2729
      %v2800 = vadd.f32 %v2199, %v2734
      %v2801 = vadd.f32 %v2202, %v2737
      %v2802 = vadd.f32 %v2207, %v2742
      %v2803 = vadd.f32 %v2210, %v2745
      %v2804 = vadd.f32 %v2215, %v2750
      %v2805 = vadd.f32 %v2218, %v2753
      %v2806 = vadd.f32 %v2223, %v2758
      %v2807 = vadd.f32 %v2226, %v2761
      %v2808 = vadd.f32 %v2231, %v2766
      %v2809 = vadd.f32 %v2234, %v2769
      %v2810 = vadd.f32 %v2239, %v2774
      %v2811 = vadd.f32 %v2242, %v2777
      %v2812 = vld [vmem:[%s2] sm:$0x1]
      %v2814 = vlaneseq
      %v2815 = vshrl.u32 %v2814, 7
      %v2816 = vsub.s32 0, %v2815
      %v2817 = vrot.slane %v2812, %v2816
      %v2819 = vadd.f32 %v2780, %v2817
      %v2820 = vadd.f32 %v2781, %v2817
      %v2821 = vadd.f32 %v2782, %v2817
      %v2822 = vadd.f32 %v2783, %v2817
      %v2823 = vadd.f32 %v2784, %v2817
      %v2824 = vadd.f32 %v2785, %v2817
      %v2825 = vadd.f32 %v2786, %v2817
      %v2826 = vadd.f32 %v2787, %v2817
      %v2827 = vadd.f32 %v2788, %v2817
      %v2828 = vadd.f32 %v2789, %v2817
      %v2829 = vadd.f32 %v2790, %v2817
      %v2830 = vadd.f32 %v2791, %v2817
      %v2831 = vadd.f32 %v2792, %v2817
      %v2832 = vadd.f32 %v2793, %v2817
      %v2833 = vadd.f32 %v2794, %v2817
      %v2834 = vadd.f32 %v2795, %v2817
      %v2835 = vadd.f32 %v2796, %v2817
      %v2836 = vadd.f32 %v2797, %v2817
      %v2837 = vadd.f32 %v2798, %v2817
      %v2838 = vadd.f32 %v2799, %v2817
      %v2839 = vadd.f32 %v2800, %v2817
      %v2840 = vadd.f32 %v2801, %v2817
      %v2841 = vadd.f32 %v2802, %v2817
      %v2842 = vadd.f32 %v2803, %v2817
      %v2843 = vadd.f32 %v2804, %v2817
      %v2844 = vadd.f32 %v2805, %v2817
      %v2845 = vadd.f32 %v2806, %v2817
      %v2846 = vadd.f32 %v2807, %v2817
      %v2847 = vadd.f32 %v2808, %v2817
      %v2848 = vadd.f32 %v2809, %v2817
      %v2849 = vadd.f32 %v2810, %v2817
      %v2850 = vadd.f32 %v2811, %v2817
      %v2851 = vmax.f32 %v2819, 0.0
      %v2852 = vmax.f32 %v2820, 0.0
      %v2853 = vmax.f32 %v2821, 0.0
      %v2854 = vmax.f32 %v2822, 0.0
      %v2855 = vmax.f32 %v2823, 0.0
      %v2856 = vmax.f32 %v2824, 0.0
      %v2857 = vmax.f32 %v2825, 0.0
      %v2858 = vmax.f32 %v2826, 0.0
      %v2859 = vmax.f32 %v2827, 0.0
      %v2860 = vmax.f32 %v2828, 0.0
      %v2861 = vmax.f32 %v2829, 0.0
      %v2862 = vmax.f32 %v2830, 0.0
      %v2863 = vmax.f32 %v2831, 0.0
      %v2864 = vmax.f32 %v2832, 0.0
      %v2865 = vmax.f32 %v2833, 0.0
      %v2866 = vmax.f32 %v2834, 0.0
      %v2867 = vmax.f32 %v2835, 0.0
      %v2868 = vmax.f32 %v2836, 0.0
      %v2869 = vmax.f32 %v2837, 0.0
      %v2870 = vmax.f32 %v2838, 0.0
      %v2871 = vmax.f32 %v2839, 0.0
      %v2872 = vmax.f32 %v2840, 0.0
      %v2873 = vmax.f32 %v2841, 0.0
      %v2874 = vmax.f32 %v2842, 0.0
      %v2875 = vmax.f32 %v2843, 0.0
      %v2876 = vmax.f32 %v2844, 0.0
      %v2877 = vmax.f32 %v2845, 0.0
      %v2878 = vmax.f32 %v2846, 0.0
      %v2879 = vmax.f32 %v2847, 0.0
      %v2880 = vmax.f32 %v2848, 0.0
      %v2881 = vmax.f32 %v2849, 0.0
      %v2882 = vmax.f32 %v2850, 0.0
      %vm2883 = vcmask 130048
      %2884 = vst.msk [vmem:[%s170] sm:$0xff] %vm2883, %v2851
      %2885 = vst.msk [vmem:[%s170 + $0x8] sm:$0xff] %vm2883, %v2852
      %2886 = vst.msk [vmem:[%s170 + $0x10] sm:$0xff] %vm2883, %v2853
      %2887 = vst.msk [vmem:[%s170 + $0x18] sm:$0xff] %vm2883, %v2854
      %2888 = vst.msk [vmem:[%s170 + $0x20] sm:$0xff] %vm2883, %v2855
      %2889 = vst.msk [vmem:[%s170 + $0x28] sm:$0xff] %vm2883, %v2856
      %2890 = vst.msk [vmem:[%s170 + $0x30] sm:$0xff] %vm2883, %v2857
      %2891 = vst.msk [vmem:[%s170 + $0x38] sm:$0xff] %vm2883, %v2858
      %2892 = vst.msk [vmem:[%s170 + $0x40] sm:$0xff] %vm2883, %v2859
      %2893 = vst.msk [vmem:[%s170 + $0x48] sm:$0xff] %vm2883, %v2860
      %2894 = vst.msk [vmem:[%s170 + $0x50] sm:$0xff] %vm2883, %v2861
      %2895 = vst.msk [vmem:[%s170 + $0x58] sm:$0xff] %vm2883, %v2862
      %2896 = vst.msk [vmem:[%s170 + $0x60] sm:$0xff] %vm2883, %v2863
      %2897 = vst.msk [vmem:[%s170 + $0x68] sm:$0xff] %vm2883, %v2864
      %2898 = vst.msk [vmem:[%s170 + $0x70] sm:$0xff] %vm2883, %v2865
      %2899 = vst.msk [vmem:[%s170 + $0x78] sm:$0xff] %vm2883, %v2866
      %2900 = vst.msk [vmem:[%s170 + $0x80] sm:$0xff] %vm2883, %v2867
      %2901 = vst.msk [vmem:[%s170 + $0x88] sm:$0xff] %vm2883, %v2868
      %2902 = vst.msk [vmem:[%s170 + $0x90] sm:$0xff] %vm2883, %v2869
      %2903 = vst.msk [vmem:[%s170 + $0x98] sm:$0xff] %vm2883, %v2870
      %2904 = vst.msk [vmem:[%s170 + $0xa0] sm:$0xff] %vm2883, %v2871
      %2905 = vst.msk [vmem:[%s170 + $0xa8] sm:$0xff] %vm2883, %v2872
      %2906 = vst.msk [vmem:[%s170 + $0xb0] sm:$0xff] %vm2883, %v2873
      %2907 = vst.msk [vmem:[%s170 + $0xb8] sm:$0xff] %vm2883, %v2874
      %2908 = vst.msk [vmem:[%s170 + $0xc0] sm:$0xff] %vm2883, %v2875
      %2909 = vst.msk [vmem:[%s170 + $0xc8] sm:$0xff] %vm2883, %v2876
      %2910 = vst.msk [vmem:[%s170 + $0xd0] sm:$0xff] %vm2883, %v2877
      %2911 = vst.msk [vmem:[%s170 + $0xd8] sm:$0xff] %vm2883, %v2878
      %2912 = vst.msk [vmem:[%s170 + $0xe0] sm:$0xff] %vm2883, %v2879
      %2913 = vst.msk [vmem:[%s170 + $0xe8] sm:$0xff] %vm2883, %v2880
      %2914 = vst.msk [vmem:[%s170 + $0xf0] sm:$0xff] %vm2883, %v2881
      %2915 = vst.msk [vmem:[%s170 + $0xf8] sm:$0xff] %vm2883, %v2882
      %p2916 = scmp.lt.s32.totalorder %s14, 1
      %s2917 = scalar_select %p2916, %s14, 1
      %s2918 = smul.addr %s2917, 32
      %s2919 = smul.addr %s2918, 8
      %s2920 = scalar_lea.vmem %s3, %s2919
      // Predicated region
      $region33: #{_lambda_.1} parent=31 // pred_check
        %p2921 = pneg %p100
      $region34: #{_lambda_.1} parent=31 // pred_check_branch
        %2923 = sbr.rel (%p2921) target = $region36
      $region35: #{_lambda_.1} parent=31 // pred_region
        _
      $region36: #{_lambda_.1} parent=31 // pred_fallthru
        _
    $region32: #{_lambda_.1} parent=5 // pred_fallthru
      _
    %p2924 = scmp.le.s32.totalorder 2, %s9
    // Predicated region
    $region37: #{_lambda_.1} parent=5 // pred_check
      %p2925 = pneg %p2924
    $region38: #{_lambda_.1} parent=5 // pred_check_branch
      %2927 = sbr.rel (%p2925) target = $region40
    $region39: #{_lambda_.1} parent=5 // pred_region
      %s2928 = ssub.s32 %s9, 2
      // Predicated region
      $region41: #{_lambda_.1} parent=39 // pred_check
        %p2929 = pneg %p106
      $region42: #{_lambda_.1} parent=39 // pred_check_branch
        %2931 = sbr.rel (%p2929) target = $region44
      $region43: #{_lambda_.1} parent=39 // pred_region
        %p2932 = scmp.lt.s32.totalorder %s15, 1
        %s2933 = scalar_select %p2932, %s15, 1
        %s2934 = smul.addr %s2933, 32
        %s2935 = smul.addr %s2934, 8
        %s2936 = scalar_lea.vmem %s3, %s2935
      $region44: #{_lambda_.1} parent=39 // pred_fallthru
        _
    $region40: #{_lambda_.1} parent=5 // pred_fallthru
      _
  $region6: #{_lambda_.1} parent=0 // loop_footer
    %s13 = sadd.s32 1, %s9
  $region7: #{_lambda_.1} parent=0 // loop_footer_branch
    %8 = sbr.rel target = $region3
  $region8: #{_lambda_.1} parent=0 // loop_exit
    _

</llo_original>
